<compile_context>
chip_gen: v5e
topology: v5e:2x2
jax: 0.10.0
libtpu: 0.0.40
codegen_flags: <defaults>
</compile_context>

<pallas_src>
import functools

import jax
import jax.numpy as jnp
from jax.experimental import pallas as pl
from jax.experimental.pallas import tpu as pltpu


# ----------------------------------------------------------------------------
# Kernels
# ----------------------------------------------------------------------------
def _stats_kernel(x_ref, w_ref, sum_ref, ssq_ref, *, total_rows):
    # x_ref:  (tn*P, C_in)   input tile (bf16 or f32)
    # w_ref:  (C_in, C_out)
    # sum_ref / ssq_ref: (1, 1, C_out) f32 -- this tile's partial BN sums.
    rows = x_ref.shape[0]
    y = jnp.dot(x_ref[...], w_ref[...], preferred_element_type=jnp.float32)
    # Mask rows of the ragged last tile: their VMEM contents are undefined
    # (possibly NaN/Inf), so select (not multiply) zeros for them.
    row0 = pl.program_id(0) * rows
    ridx = jax.lax.broadcasted_iota(jnp.int32, (rows, 1), 0) + row0
    y = jnp.where(ridx < total_rows, y, 0.0)
    sum_ref[...] = jnp.sum(y, axis=0, keepdims=True)[None]
    ssq_ref[...] = jnp.sum(y * y, axis=0, keepdims=True)[None]


def _apply_concat_kernel(x_ref, w_ref, scale_ref, shift_ref, out_ref):
    # out_ref: (tn, P, 2*C_out) -- [BN+ReLU(x@W) | per-pillar max] concat.
    tn, P, _ = out_ref.shape
    c = scale_ref.shape[-1]
    y = jnp.dot(x_ref[...], w_ref[...], preferred_element_type=jnp.float32)
    z = jnp.maximum(y * scale_ref[...] + shift_ref[...], 0.0)   # BN affine+ReLU
    # Cast to the (bf16) output dtype BEFORE the concat/broadcast: halves the
    # store-path temporaries. Rounding is monotone, so max commutes with it.
    z3 = z.reshape(tn, P, c).astype(out_ref.dtype)               # row-split only
    z_max = jnp.max(z3, axis=1, keepdims=True)                   # (tn, 1, C)
    out_ref[...] = jnp.concatenate(
        [z3, jnp.broadcast_to(z_max, z3.shape)], axis=2)


def _apply_split_kernel(x_ref, w_ref, scale_ref, shift_ref, z_ref, zmax_ref):
    # Split-output variant: no 32x-duplicated max written to HBM.
    tn, P, c = z_ref.shape
    y = jnp.dot(x_ref[...], w_ref[...], preferred_element_type=jnp.float32)
    z = jnp.maximum(y * scale_ref[...] + shift_ref[...], 0.0)
    z3 = z.reshape(tn, P, c).astype(z_ref.dtype)
    z_ref[...] = z3
    zmax_ref[...] = jnp.max(z3, axis=1, keepdims=True).astype(zmax_ref.dtype)


def _apply_max_kernel(x_ref, w_ref, scale_ref, shift_ref, out_ref):
    # last_layer variant: out_ref: (tn, C_out) -- per-pillar max only.
    tn, c = out_ref.shape
    P = x_ref.shape[0] // tn
    y = jnp.dot(x_ref[...], w_ref[...], preferred_element_type=jnp.float32)
    z = jnp.maximum(y * scale_ref[...] + shift_ref[...], 0.0)
    z3 = z.reshape(tn, P, c).astype(out_ref.dtype)
    out_ref[...] = jnp.max(z3, axis=1)


# ----------------------------------------------------------------------------
# Wrapper
# ----------------------------------------------------------------------------
def _default_tile_and_vmem():
    """Generation-split defaults (v7x has only 64 MiB VMEM per TensorCore)."""
    try:
        kind = jax.devices()[0].device_kind.lower()
    except Exception:
        kind = ""
    if any(g in kind for g in ("v4", "v5", "v6")):
        return 512, 96 * 1024 * 1024      # 128 MiB parts: big tiles
    return 192, 48 * 1024 * 1024           # v7x / unknown: conservative


def pfn_layer_forward(inputs, weight, gamma=None, beta=None, bias=None, *,
                      eps=1e-3, use_norm=True, last_layer=False,
                      tile_pillars=None, out_dtype=None,
                      vmem_limit_bytes=None, return_split=False):
    """PFNlayer forward (training-mode BatchNorm1d statistics).

    inputs: (N, P, C_in) f32/bf16  (bf16 recommended: halves input HBM reads)
    weight: (C_out, C_in)          PyTorch nn.Linear layout
    gamma, beta: (C_out,)          BN affine params (use_norm=True)
    bias: (C_out,) or None         Linear bias (use_norm=False)
    Returns (N, P, 2*C_out) if not last_layer else (N, 1, C_out);
    if return_split (and not last_layer): ((N, P, C_out), (N, 1, C_out)).
    """
    N, P, C_in = inputs.shape
    C_out = weight.shape[0]

    default_tile, default_vmem = _default_tile_and_vmem()
    if tile_pillars is None:
        tile_pillars = default_tile
    if vmem_limit_bytes is None:
        vmem_limit_bytes = default_vmem

    x = inputs if jnp.issubdtype(inputs.dtype, jnp.floating) \
        else inputs.astype(jnp.float32)
    if out_dtype is None:
        out_dtype = x.dtype                     # bf16 in -> bf16 out (default)
    wt = jnp.asarray(weight).astype(x.dtype).T  # (C_in, C_out)

    # Pillar tiling shared by both passes: tn pillars -> tn*P matmul rows.
    if N <= tile_pillars:
        tn = N                                  # single tile
    else:
        tn = max(8, (tile_pillars // 8) * 8)
    n_tiles = pl.cdiv(N, tn)
    # No wrapper-side jnp.pad: the ragged last tile is masked in-kernel and
    # Pallas drops out-of-bounds output writes.
    x_flat = x.reshape(N * P, C_in)

    cparams = pltpu.CompilerParams(
        dimension_semantics=("parallel",),
        vmem_limit_bytes=vmem_limit_bytes)

    if use_norm:
        # ---- Pass 1: per-tile partial sums of y and y^2 (y = x @ W^T) ------
        psum, pssq = pl.pallas_call(
            functools.partial(_stats_kernel, total_rows=N * P),
            out_shape=(jax.ShapeDtypeStruct((n_tiles, 1, C_out), jnp.float32),
                       jax.ShapeDtypeStruct((n_tiles, 1, C_out), jnp.float32)),
            grid_spec=pltpu.PrefetchScalarGridSpec(
                num_scalar_prefetch=0,
                grid=(n_tiles,),
                in_specs=[pl.BlockSpec((tn * P, C_in), lambda i: (i, 0)),
                          pl.BlockSpec((C_in, C_out), lambda i: (0, 0))],
                out_specs=(pl.BlockSpec((1, 1, C_out), lambda i: (i, 0, 0)),
                           pl.BlockSpec((1, 1, C_out), lambda i: (i, 0, 0)))),
            compiler_params=cparams,
        )(x_flat, wt)

        # Training-mode BatchNorm1d batch stats (biased var), folded to affine.
        cnt = jnp.float32(N * P)
        s = jnp.sum(psum[:, 0, :], axis=0)
        ssq = jnp.sum(pssq[:, 0, :], axis=0)
        mean = s / cnt
        var = jnp.maximum(ssq / cnt - mean * mean, 0.0)   # clamp cancellation
        scale = jnp.asarray(gamma, jnp.float32) * jax.lax.rsqrt(var + eps)
        shift = jnp.asarray(beta, jnp.float32) - mean * scale
    else:
        scale = jnp.ones((C_out,), jnp.float32)
        shift = (jnp.zeros((C_out,), jnp.float32) if bias is None
                 else jnp.asarray(bias, jnp.float32))

    scale2 = scale.reshape(1, C_out)
    shift2 = shift.reshape(1, C_out)

    in_specs = [pl.BlockSpec((tn * P, C_in), lambda i: (i, 0)),
                pl.BlockSpec((C_in, C_out), lambda i: (0, 0)),
                pl.BlockSpec((1, C_out), lambda i: (0, 0)),
                pl.BlockSpec((1, C_out), lambda i: (0, 0))]

    # ---- Pass 2: recompute matmul, fuse BN + ReLU + max (+ concat) ---------
    if last_layer:
        out = pl.pallas_call(
            _apply_max_kernel,
            out_shape=jax.ShapeDtypeStruct((N, C_out), out_dtype),
            grid_spec=pltpu.PrefetchScalarGridSpec(
                num_scalar_prefetch=0, grid=(n_tiles,),
                in_specs=in_specs,
                out_specs=pl.BlockSpec((tn, C_out), lambda i: (i, 0))),
            compiler_params=cparams,
        )(x_flat, wt, scale2, shift2)
        return out.reshape(N, 1, C_out)

    if return_split:
        z_out, zmax_out = pl.pallas_call(
            _apply_split_kernel,
            out_shape=(jax.ShapeDtypeStruct((N, P, C_out), out_dtype),
                       jax.ShapeDtypeStruct((N, 1, C_out), out_dtype)),
            grid_spec=pltpu.PrefetchScalarGridSpec(
                num_scalar_prefetch=0, grid=(n_tiles,),
                in_specs=in_specs,
                out_specs=(pl.BlockSpec((tn, P, C_out), lambda i: (i, 0, 0)),
                           pl.BlockSpec((tn, 1, C_out), lambda i: (i, 0, 0)))),
            compiler_params=cparams,
        )(x_flat, wt, scale2, shift2)
        return z_out, zmax_out

    out = pl.pallas_call(
        _apply_concat_kernel,
        out_shape=jax.ShapeDtypeStruct((N, P, 2 * C_out), out_dtype),
        grid_spec=pltpu.PrefetchScalarGridSpec(
            num_scalar_prefetch=0, grid=(n_tiles,),
            in_specs=in_specs,
            out_specs=pl.BlockSpec((tn, P, 2 * C_out), lambda i: (i, 0, 0))),
        compiler_params=cparams,
    )(x_flat, wt, scale2, shift2)
    return out


# ----------------------------------------------------------------------------
# Pure-JAX reference mirroring the PyTorch forward (training-mode BN)
# ----------------------------------------------------------------------------
def pfn_layer_ref(inputs, weight, gamma, beta, eps=1e-3, last_layer=False):
    x = jnp.einsum('npc,oc->npo', inputs.astype(jnp.float32),
                   weight.astype(jnp.float32))
    mean = jnp.mean(x, axis=(0, 1))
    var = jnp.mean((x - mean) ** 2, axis=(0, 1))
    x = (x - mean) / jnp.sqrt(var + eps) * gamma + beta
    x = jnp.maximum(x, 0.0)
    x_max = jnp.max(x, axis=1, keepdims=True)
    if last_layer:
        return x_max
    return jnp.concatenate([x, jnp.broadcast_to(x_max, x.shape)], axis=2)


if __name__ == "__main__":
    key = jax.random.PRNGKey(0)
    k_in, k_w = jax.random.split(key)

    # Shapes consistent with the module: in_channels=10, out_channels=64,
    # P=32 points per pillar; small pillar count for the demo.
    N, P, C_in, out_channels = 20, 32, 10, 64
    C_out = out_channels // 2            # not last layer -> Linear out = 32

    inputs = jax.random.normal(k_in, (N, P, C_in), dtype=jnp.float32)
    weight = 0.1 * jax.random.normal(k_w, (C_out, C_in), dtype=jnp.float32)
    gamma = 1.0 + 0.01 * jnp.arange(C_out, dtype=jnp.float32)
    beta = 0.02 * jnp.arange(C_out, dtype=jnp.float32) - 0.3

    # bf16 inputs/weight (halves input reads AND, now, the output writeback);
    # the reference uses the same bf16-rounded values, computed in f32.
    x_bf16 = inputs.astype(jnp.bfloat16)
    w_bf16 = weight.astype(jnp.bfloat16)
    ref = pfn_layer_ref(x_bf16, w_bf16, gamma, beta, last_layer=False)

    # 1) default tiling (single tile here), concat output, bf16 output dtype.
    out = jax.block_until_ready(
        pfn_layer_forward(x_bf16, w_bf16, gamma, beta, last_layer=False))
    assert out.shape == (N, P, out_channels), out.shape
    assert out.dtype == jnp.bfloat16, out.dtype
    assert jnp.allclose(out.astype(jnp.float32), ref, atol=1e-2, rtol=1e-2), \
        float(jnp.max(jnp.abs(out.astype(jnp.float32) - ref)))

    # 2) multi-tile + ragged-last-tile path (N=20, tn=8 -> 3 tiles, 4 masked).
    out2 = jax.block_until_ready(
        pfn_layer_forward(x_bf16, w_bf16, gamma, beta, last_layer=False,
                          tile_pillars=8))
    assert jnp.allclose(out2.astype(jnp.float32), ref, atol=1e-2, rtol=1e-2), \
        float(jnp.max(jnp.abs(out2.astype(jnp.float32) - ref)))

    # 3) split-output path (no 32x-duplicated max writeback).
    z_out, zmax_out = jax.block_until_ready(
        pfn_layer_forward(x_bf16, w_bf16, gamma, beta, last_layer=False,
                          tile_pillars=8, return_split=True))
    assert z_out.shape == (N, P, C_out) and zmax_out.shape == (N, 1, C_out)
    assert jnp.allclose(z_out.astype(jnp.float32), ref[:, :, :C_out],
                        atol=1e-2, rtol=1e-2)
    assert jnp.allclose(zmax_out.astype(jnp.float32), ref[:, :1, C_out:],
                        atol=1e-2, rtol=1e-2)

    # 4) last-layer variant (max only), full 64-channel linear.
    w_last = 0.1 * jax.random.normal(jax.random.PRNGKey(2),
                                     (out_channels, C_in), dtype=jnp.float32)
    g_last = jnp.ones((out_channels,), jnp.float32)
    b_last = jnp.zeros((out_channels,), jnp.float32)
    out3 = jax.block_until_ready(
        pfn_layer_forward(x_bf16, w_last.astype(jnp.bfloat16), g_last, b_last,
                          last_layer=True, tile_pillars=8))
    ref3 = pfn_layer_ref(x_bf16, w_last.astype(jnp.bfloat16), g_last, b_last,
                         last_layer=True)
    assert out3.shape == (N, 1, out_channels), out3.shape
    assert jnp.allclose(out3.astype(jnp.float32), ref3, atol=1e-2, rtol=1e-2), \
        float(jnp.max(jnp.abs(out3.astype(jnp.float32) - ref3)))

    print("KERNEL_OK")
</pallas_src>

<mosaic_0001>
module attributes {stable_mosaic.version = 11 : i64} {
  func.func @_stats_kernel(%arg0: i32, %arg1: memref<640x10xbf16, #tpu.memory_space<vmem>>, %arg2: memref<10x32xbf16, #tpu.memory_space<vmem>>, %arg3: memref<1x1x32xf32, #tpu.memory_space<vmem>>, %arg4: memref<1x1x32xf32, #tpu.memory_space<vmem>>) attributes {dimension_semantics = [#tpu.dimension_semantics<parallel>], iteration_bounds = array<i64: 1>, scalar_prefetch = 0 : i64, scratch_operands = 0 : i64, tpu.core_type = #tpu.core_type<tc>, window_params = [{transform_indices = @transform_0, window_bounds = array<i64: 640, 10>}, {pipeline_mode = #tpu.pipeline_mode<synchronous>, transform_indices = @transform_1, window_bounds = array<i64: 10, 32>}, {transform_indices = @transform_2, window_bounds = array<i64: 1, 1, 32>}, {transform_indices = @transform_3, window_bounds = array<i64: 1, 1, 32>}]} {
    %c0 = arith.constant 0 : index
    %c0_0 = arith.constant 0 : index
    %0 = vector.load %arg1[%c0, %c0_0] : memref<640x10xbf16, #tpu.memory_space<vmem>>, vector<640x10xbf16>
    %c0_1 = arith.constant 0 : index
    %c0_2 = arith.constant 0 : index
    %1 = vector.load %arg2[%c0_1, %c0_2] : memref<10x32xbf16, #tpu.memory_space<vmem>>, vector<10x32xbf16>
    %cst = arith.constant dense<0.000000e+00> : vector<640x32xf32>
    %2 = tpu.matmul %0, %1, %cst {dimension_numbers = #tpu.dot_dimension_numbers<[1], [0], [0], [1], [0, 0, 1, 1], [], []>} : vector<640x10xbf16>, vector<10x32xbf16>, vector<640x32xf32> -> vector<640x32xf32>
    %c640_i32 = arith.constant 640 : i32
    %3 = arith.muli %arg0, %c640_i32 : i32
    %4 = tpu.iota {dimensions = array<i32: 0>} : vector<640x1xi32>
    %5 = vector.broadcast %3 : i32 to vector<640x1xi32>
    %6 = arith.addi %4, %5 : vector<640x1xi32>
    %c640_i32_3 = arith.constant 640 : i32
    %7 = vector.broadcast %c640_i32_3 : i32 to vector<640x1xi32>
    %8 = arith.cmpi slt, %6, %7 : vector<640x1xi32>
    %cst_4 = arith.constant 0.000000e+00 : f32
    %9 = vector.shape_cast %8 : vector<640x1xi1> to vector<640x1xi1>
    %10 = vector.broadcast %9 : vector<640x1xi1> to vector<640x32xi1>
    %11 = vector.broadcast %cst_4 : f32 to vector<640x32xf32>
    %12 = arith.select %10, %2, %11 : vector<640x32xi1>, vector<640x32xf32>
    %cst_5 = arith.constant dense<0.000000e+00> : vector<32xf32>
    %13 = vector.multi_reduction <add>, %12, %cst_5 [0] : vector<640x32xf32> to vector<32xf32>
    %14 = vector.shape_cast %13 : vector<32xf32> to vector<1x32xf32>
    %15 = vector.shape_cast %14 : vector<1x32xf32> to vector<1x1x32xf32>
    %c0_6 = arith.constant 0 : index
    %c0_7 = arith.constant 0 : index
    %c0_8 = arith.constant 0 : index
    %16 = vector.load %arg3[%c0_6, %c0_7, %c0_8] : memref<1x1x32xf32, #tpu.memory_space<vmem>>, vector<1x1x32xf32>
    tpu.vector_store %arg3[%c0_6, %c0_7, %c0_8], %15 {strides = array<i32>} : memref<1x1x32xf32, #tpu.memory_space<vmem>>, vector<1x1x32xf32>,
    %17 = arith.mulf %12, %12 : vector<640x32xf32>
    %cst_9 = arith.constant dense<0.000000e+00> : vector<32xf32>
    %18 = vector.multi_reduction <add>, %17, %cst_9 [0] : vector<640x32xf32> to vector<32xf32>
    %19 = vector.shape_cast %18 : vector<32xf32> to vector<1x32xf32>
    %20 = vector.shape_cast %19 : vector<1x32xf32> to vector<1x1x32xf32>
    %c0_10 = arith.constant 0 : index
    %c0_11 = arith.constant 0 : index
    %c0_12 = arith.constant 0 : index
    %21 = vector.load %arg4[%c0_10, %c0_11, %c0_12] : memref<1x1x32xf32, #tpu.memory_space<vmem>>, vector<1x1x32xf32>
    tpu.vector_store %arg4[%c0_10, %c0_11, %c0_12], %20 {strides = array<i32>} : memref<1x1x32xf32, #tpu.memory_space<vmem>>, vector<1x1x32xf32>,
    return
  }
  func.func @transform_0(%arg0: i32) -> (i32, i32) {
    %c0_i32 = arith.constant 0 : i32
    %c0_i32_0 = arith.constant 0 : i32
    return %arg0, %c0_i32 : i32, i32
  }
  func.func @transform_1(%arg0: i32) -> (i32, i32) {
    %c0_i32 = arith.constant 0 : i32
    %c0_i32_0 = arith.constant 0 : i32
    %c0_i32_1 = arith.constant 0 : i32
    return %c0_i32, %c0_i32_0 : i32, i32
  }
  func.func @transform_2(%arg0: i32) -> (i32, i32, i32) {
    %c0_i32 = arith.constant 0 : i32
    %c0_i32_0 = arith.constant 0 : i32
    %c0_i32_1 = arith.constant 0 : i32
    return %arg0, %c0_i32, %c0_i32_0 : i32, i32, i32
  }
  func.func @transform_3(%arg0: i32) -> (i32, i32, i32) {
    %c0_i32 = arith.constant 0 : i32
    %c0_i32_0 = arith.constant 0 : i32
    %c0_i32_1 = arith.constant 0 : i32
    return %arg0, %c0_i32, %c0_i32_0 : i32, i32, i32
  }
}

</mosaic_0001>

<llo_original>
// kernel: tpu_custom_call.1
$region0: #{tpu_custom_call.1}
  #allocation0 [shape = 'u32[]', space=smem, size = 0x4, offset = 0x4, fixed_abs, tag = 'smem constant byte address 0x4 - core index']
  #allocation1 [shape = 'u32[72,128]{1,0:T(1,128)}', space=vmem, size = 0x9000, scoped, tag = 'internal scratch']
  %s0 = inlined_call_operand.vmem [shape: bf16[640,10], index: 0, kind: input, shape index: {}]
  %s1 = inlined_call_operand.vmem [shape: bf16[10,32], index: 1, kind: input, shape index: {}]
  %s2 = inlined_call_operand.hbm [shape: f32[1,1,32], index: 2, kind: output, shape index: {0}]
  %s3 = inlined_call_operand.hbm [shape: f32[1,1,32], index: 3, kind: output, shape index: {1}]
  %4 = xla_tuple %s2, %s3
  %s5 = sld [smem:[#allocation0]]
  $region26: #{tpu_custom_call.1} parent=0
    _
  %s7 = ssub.s32 1, %s5
  %s8 = scalar_select 0, %s7, %s5
  $region1: #{tpu_custom_call.1} parent=0
    #allocation2 [shape = 'u8[512]{0}', space=vmem, size = 0x400, scoped, tag = 'output window, operand 0, single buffered']
    #allocation3 [shape = 's32[1]{0}', space=sflag, size = 0x4, scoped, tag = 'scoped memory for tpu_custom_call.1']
    #allocation4 [shape = 'u8[512]{0}', space=vmem, size = 0x400, scoped, tag = 'output window, operand 1, single buffered']
    #allocation5 [shape = 's32[1]{0}', space=sflag, size = 0x4, scoped, tag = 'scoped memory for tpu_custom_call.1']
    %9 = vsyncpa [#allocation3], 0
    %10 = vsyncpa [#allocation5], 0
    // Predicated region
    $region2: #{tpu_custom_call.1} parent=1 // pred_check
      _
    $region3: #{tpu_custom_call.1} parent=1 // pred_check_branch
      %12 = sbr.rel (0) target = $region5
    $region4: #{tpu_custom_call.1} parent=1 // pred_region
      _
    $region5: #{tpu_custom_call.1} parent=1 // pred_fallthru
      _
    // Predicated region
    $region6: #{tpu_custom_call.1} parent=1 // pred_check
      _
    $region7: #{tpu_custom_call.1} parent=1 // pred_check_branch
      %14 = sbr.rel (0) target = $region9
    $region8: #{tpu_custom_call.1} parent=1 // pred_region
      _
    $region9: #{tpu_custom_call.1} parent=1 // pred_fallthru
      _
    %v16 = vld [vmem:[%s0] sm:$0xf]
    %v17 = vld [vmem:[%s0 + $0x4] sm:$0xf]
    %v18 = vld [vmem:[%s0 + $0x8] sm:$0xf]
    %v19 = vld [vmem:[%s0 + $0xc] sm:$0xf]
    %v20 = vld [vmem:[%s0 + $0x10] sm:$0xf]
    %v21 = vld [vmem:[%s0 + $0x14] sm:$0xf]
    %v22 = vld [vmem:[%s0 + $0x18] sm:$0xf]
    %v23 = vld [vmem:[%s0 + $0x1c] sm:$0xf]
    %v24 = vld [vmem:[%s0 + $0x20] sm:$0xf]
    %v25 = vld [vmem:[%s0 + $0x24] sm:$0xf]
    %v26 = vld [vmem:[%s0 + $0x28] sm:$0xf]
    %v27 = vld [vmem:[%s0 + $0x2c] sm:$0xf]
    %v28 = vld [vmem:[%s0 + $0x30] sm:$0xf]
    %v29 = vld [vmem:[%s0 + $0x34] sm:$0xf]
    %v30 = vld [vmem:[%s0 + $0x38] sm:$0xf]
    %v31 = vld [vmem:[%s0 + $0x3c] sm:$0xf]
    %v32 = vld [vmem:[%s0 + $0x40] sm:$0xf]
    %v33 = vld [vmem:[%s0 + $0x44] sm:$0xf]
    %v34 = vld [vmem:[%s0 + $0x48] sm:$0xf]
    %v35 = vld [vmem:[%s0 + $0x4c] sm:$0xf]
    %v36 = vld [vmem:[%s0 + $0x50] sm:$0xf]
    %v37 = vld [vmem:[%s0 + $0x54] sm:$0xf]
    %v38 = vld [vmem:[%s0 + $0x58] sm:$0xf]
    %v39 = vld [vmem:[%s0 + $0x5c] sm:$0xf]
    %v40 = vld [vmem:[%s0 + $0x60] sm:$0xf]
    %v41 = vld [vmem:[%s0 + $0x64] sm:$0xf]
    %v42 = vld [vmem:[%s0 + $0x68] sm:$0xf]
    %v43 = vld [vmem:[%s0 + $0x6c] sm:$0xf]
    %v44 = vld [vmem:[%s0 + $0x70] sm:$0xf]
    %v45 = vld [vmem:[%s0 + $0x74] sm:$0xf]
    %v46 = vld [vmem:[%s0 + $0x78] sm:$0xf]
    %v47 = vld [vmem:[%s0 + $0x7c] sm:$0xf]
    %v48 = vld [vmem:[%s0 + $0x80] sm:$0xf]
    %v49 = vld [vmem:[%s0 + $0x84] sm:$0xf]
    %v50 = vld [vmem:[%s0 + $0x88] sm:$0xf]
    %v51 = vld [vmem:[%s0 + $0x8c] sm:$0xf]
    %v52 = vld [vmem:[%s0 + $0x90] sm:$0xf]
    %v53 = vld [vmem:[%s0 + $0x94] sm:$0xf]
    %v54 = vld [vmem:[%s0 + $0x98] sm:$0xf]
    %v55 = vld [vmem:[%s0 + $0x9c] sm:$0xf]
    %v56 = vld [vmem:[%s0 + $0xa0] sm:$0xf]
    %v57 = vld [vmem:[%s0 + $0xa4] sm:$0xf]
    %v58 = vld [vmem:[%s0 + $0xa8] sm:$0xf]
    %v59 = vld [vmem:[%s0 + $0xac] sm:$0xf]
    %v60 = vld [vmem:[%s0 + $0xb0] sm:$0xf]
    %v61 = vld [vmem:[%s0 + $0xb4] sm:$0xf]
    %v62 = vld [vmem:[%s0 + $0xb8] sm:$0xf]
    %v63 = vld [vmem:[%s0 + $0xbc] sm:$0xf]
    %v64 = vld [vmem:[%s0 + $0xc0] sm:$0xf]
    %v65 = vld [vmem:[%s0 + $0xc4] sm:$0xf]
    %v66 = vld [vmem:[%s0 + $0xc8] sm:$0xf]
    %v67 = vld [vmem:[%s0 + $0xcc] sm:$0xf]
    %v68 = vld [vmem:[%s0 + $0xd0] sm:$0xf]
    %v69 = vld [vmem:[%s0 + $0xd4] sm:$0xf]
    %v70 = vld [vmem:[%s0 + $0xd8] sm:$0xf]
    %v71 = vld [vmem:[%s0 + $0xdc] sm:$0xf]
    %v72 = vld [vmem:[%s0 + $0xe0] sm:$0xf]
    %v73 = vld [vmem:[%s0 + $0xe4] sm:$0xf]
    %v74 = vld [vmem:[%s0 + $0xe8] sm:$0xf]
    %v75 = vld [vmem:[%s0 + $0xec] sm:$0xf]
    %v76 = vld [vmem:[%s0 + $0xf0] sm:$0xf]
    %v77 = vld [vmem:[%s0 + $0xf4] sm:$0xf]
    %v78 = vld [vmem:[%s0 + $0xf8] sm:$0xf]
    %v79 = vld [vmem:[%s0 + $0xfc] sm:$0xf]
    %v80 = vld [vmem:[%s0 + $0x100] sm:$0xf]
    %v81 = vld [vmem:[%s0 + $0x104] sm:$0xf]
    %v82 = vld [vmem:[%s0 + $0x108] sm:$0xf]
    %v83 = vld [vmem:[%s0 + $0x10c] sm:$0xf]
    %v84 = vld [vmem:[%s0 + $0x110] sm:$0xf]
    %v85 = vld [vmem:[%s0 + $0x114] sm:$0xf]
    %v86 = vld [vmem:[%s0 + $0x118] sm:$0xf]
    %v87 = vld [vmem:[%s0 + $0x11c] sm:$0xf]
    %v88 = vld [vmem:[%s0 + $0x120] sm:$0xf]
    %v89 = vld [vmem:[%s0 + $0x124] sm:$0xf]
    %v90 = vld [vmem:[%s0 + $0x128] sm:$0xf]
    %v91 = vld [vmem:[%s0 + $0x12c] sm:$0xf]
    %v92 = vld [vmem:[%s0 + $0x130] sm:$0xf]
    %v93 = vld [vmem:[%s0 + $0x134] sm:$0xf]
    %v94 = vld [vmem:[%s0 + $0x138] sm:$0xf]
    %v95 = vld [vmem:[%s0 + $0x13c] sm:$0xf]
    %v96 = vld [vmem:[%s1] sm:$0xf]
    %v97 = vld [vmem:[%s1 + $0x4] sm:$0x1]
    %v178 = vunpack.c.l.b16 %v16
    %v179 = vunpack.c.l.b16 %v17
    %v180 = vunpack.c.l.b16 %v18
    %v181 = vunpack.c.l.b16 %v19
    %v182 = vunpack.c.l.b16 %v20
    %v183 = vunpack.c.l.b16 %v21
    %v184 = vunpack.c.l.b16 %v22
    %v185 = vunpack.c.l.b16 %v23
    %v186 = vunpack.c.l.b16 %v24
    %v187 = vunpack.c.l.b16 %v25
    %v188 = vunpack.c.l.b16 %v26
    %v189 = vunpack.c.l.b16 %v27
    %v190 = vunpack.c.l.b16 %v28
    %v191 = vunpack.c.l.b16 %v29
    %v192 = vunpack.c.l.b16 %v30
    %v193 = vunpack.c.l.b16 %v31
    %v194 = vunpack.c.l.b16 %v32
    %v195 = vunpack.c.l.b16 %v33
    %v196 = vunpack.c.l.b16 %v34
    %v197 = vunpack.c.l.b16 %v35
    %v198 = vunpack.c.l.b16 %v36
    %v199 = vunpack.c.l.b16 %v37
    %v200 = vunpack.c.l.b16 %v38
    %v201 = vunpack.c.l.b16 %v39
    %v202 = vunpack.c.l.b16 %v40
    %v203 = vunpack.c.l.b16 %v41
    %v204 = vunpack.c.l.b16 %v42
    %v205 = vunpack.c.l.b16 %v43
    %v206 = vunpack.c.l.b16 %v44
    %v207 = vunpack.c.l.b16 %v45
    %v208 = vunpack.c.l.b16 %v46
    %v209 = vunpack.c.l.b16 %v47
    %v210 = vunpack.c.l.b16 %v48
    %v211 = vunpack.c.l.b16 %v49
    %v212 = vunpack.c.l.b16 %v50
    %v213 = vunpack.c.l.b16 %v51
    %v214 = vunpack.c.l.b16 %v52
    %v215 = vunpack.c.l.b16 %v53
    %v216 = vunpack.c.l.b16 %v54
    %v217 = vunpack.c.l.b16 %v55
    %v218 = vunpack.c.l.b16 %v56
    %v219 = vunpack.c.l.b16 %v57
    %v220 = vunpack.c.l.b16 %v58
    %v221 = vunpack.c.l.b16 %v59
    %v222 = vunpack.c.l.b16 %v60
    %v223 = vunpack.c.l.b16 %v61
    %v224 = vunpack.c.l.b16 %v62
    %v225 = vunpack.c.l.b16 %v63
    %v226 = vunpack.c.l.b16 %v64
    %v227 = vunpack.c.l.b16 %v65
    %v228 = vunpack.c.l.b16 %v66
    %v229 = vunpack.c.l.b16 %v67
    %v230 = vunpack.c.l.b16 %v68
    %v231 = vunpack.c.l.b16 %v69
    %v232 = vunpack.c.l.b16 %v70
    %v233 = vunpack.c.l.b16 %v71
    %v234 = vunpack.c.l.b16 %v72
    %v235 = vunpack.c.l.b16 %v73
    %v236 = vunpack.c.l.b16 %v74
    %v237 = vunpack.c.l.b16 %v75
    %v238 = vunpack.c.l.b16 %v76
    %v239 = vunpack.c.l.b16 %v77
    %v240 = vunpack.c.l.b16 %v78
    %v241 = vunpack.c.l.b16 %v79
    %v242 = vunpack.c.l.b16 %v80
    %v243 = vunpack.c.l.b16 %v81
    %v244 = vunpack.c.l.b16 %v82
    %v245 = vunpack.c.l.b16 %v83
    %v246 = vunpack.c.l.b16 %v84
    %v247 = vunpack.c.l.b16 %v85
    %v248 = vunpack.c.l.b16 %v86
    %v249 = vunpack.c.l.b16 %v87
    %v250 = vunpack.c.l.b16 %v88
    %v251 = vunpack.c.l.b16 %v89
    %v252 = vunpack.c.l.b16 %v90
    %v253 = vunpack.c.l.b16 %v91
    %v254 = vunpack.c.l.b16 %v92
    %v255 = vunpack.c.l.b16 %v93
    %v256 = vunpack.c.l.b16 %v94
    %v257 = vunpack.c.l.b16 %v95
    %v258 = vpack.c.b16 %v179, %v178
    %v259 = vpack.c.b16 %v181, %v180
    %v260 = vpack.c.b16 %v183, %v182
    %v261 = vpack.c.b16 %v185, %v184
    %v262 = vpack.c.b16 %v187, %v186
    %v263 = vpack.c.b16 %v189, %v188
    %v264 = vpack.c.b16 %v191, %v190
    %v265 = vpack.c.b16 %v193, %v192
    %v266 = vpack.c.b16 %v195, %v194
    %v267 = vpack.c.b16 %v197, %v196
    %v268 = vpack.c.b16 %v199, %v198
    %v269 = vpack.c.b16 %v201, %v200
    %v270 = vpack.c.b16 %v203, %v202
    %v271 = vpack.c.b16 %v205, %v204
    %v272 = vpack.c.b16 %v207, %v206
    %v273 = vpack.c.b16 %v209, %v208
    %v274 = vpack.c.b16 %v211, %v210
    %v275 = vpack.c.b16 %v213, %v212
    %v276 = vpack.c.b16 %v215, %v214
    %v277 = vpack.c.b16 %v217, %v216
    %v278 = vpack.c.b16 %v219, %v218
    %v279 = vpack.c.b16 %v221, %v220
    %v280 = vpack.c.b16 %v223, %v222
    %v281 = vpack.c.b16 %v225, %v224
    %v282 = vpack.c.b16 %v227, %v226
    %v283 = vpack.c.b16 %v229, %v228
    %v284 = vpack.c.b16 %v231, %v230
    %v285 = vpack.c.b16 %v233, %v232
    %v286 = vpack.c.b16 %v235, %v234
    %v287 = vpack.c.b16 %v237, %v236
    %v288 = vpack.c.b16 %v239, %v238
    %v289 = vpack.c.b16 %v241, %v240
    %v290 = vpack.c.b16 %v243, %v242
    %v291 = vpack.c.b16 %v245, %v244
    %v292 = vpack.c.b16 %v247, %v246
    %v293 = vpack.c.b16 %v249, %v248
    %v294 = vpack.c.b16 %v251, %v250
    %v295 = vpack.c.b16 %v253, %v252
    %v296 = vpack.c.b16 %v255, %v254
    %v297 = vpack.c.b16 %v257, %v256
    %v300 = vunpack.c.l.b16 %v96
    %v301 = vunpack.c.l.b16 %v97
    %v302 = vpack.c.b16 %v301, %v300
    %vm303 = vcmask 80896
    %v305 = vsel %vm303, %v258, 0
    %v308 = vsel %vm303, %v259, 0
    %v311 = vsel %vm303, %v260, 0
    %v314 = vsel %vm303, %v261, 0
    %v317 = vsel %vm303, %v262, 0
    %v320 = vsel %vm303, %v263, 0
    %v323 = vsel %vm303, %v264, 0
    %v326 = vsel %vm303, %v265, 0
    %v329 = vsel %vm303, %v266, 0
    %v332 = vsel %vm303, %v267, 0
    %v335 = vsel %vm303, %v268, 0
    %v338 = vsel %vm303, %v269, 0
    %v341 = vsel %vm303, %v270, 0
    %v344 = vsel %vm303, %v271, 0
    %v347 = vsel %vm303, %v272, 0
    %v350 = vsel %vm303, %v273, 0
    %v353 = vsel %vm303, %v274, 0
    %v356 = vsel %vm303, %v275, 0
    %v359 = vsel %vm303, %v276, 0
    %v362 = vsel %vm303, %v277, 0
    %v365 = vsel %vm303, %v278, 0
    %v368 = vsel %vm303, %v279, 0
    %v371 = vsel %vm303, %v280, 0
    %v374 = vsel %vm303, %v281, 0
    %v377 = vsel %vm303, %v282, 0
    %v380 = vsel %vm303, %v283, 0
    %v383 = vsel %vm303, %v284, 0
    %v386 = vsel %vm303, %v285, 0
    %v389 = vsel %vm303, %v286, 0
    %v392 = vsel %vm303, %v287, 0
    %v395 = vsel %vm303, %v288, 0
    %v398 = vsel %vm303, %v289, 0
    %v401 = vsel %vm303, %v290, 0
    %v404 = vsel %vm303, %v291, 0
    %v407 = vsel %vm303, %v292, 0
    %v410 = vsel %vm303, %v293, 0
    %v413 = vsel %vm303, %v294, 0
    %v416 = vsel %vm303, %v295, 0
    %v419 = vsel %vm303, %v296, 0
    %v422 = vsel %vm303, %v297, 0
    %vm424 = vcmask 1044480
    %v426 = vsel %vm424, %v302, 0
    %428 = vmatpush.bf16.msra.mxu0 0
    %429 = vmatpush.bf16.msra.mxu0 0
    %430 = vmatpush.bf16.msra.mxu0 0
    %431 = vmatpush.bf16.msra.mxu0 0
    %432 = vmatpush.bf16.msra.mxu0 0
    %433 = vmatpush.bf16.msra.mxu0 0
    %434 = vmatpush.bf16.msra.mxu0 0
    %435 = vmatpush.bf16.msra.mxu0 %v426
    %436 = vmatmul.bf16.gmra.mxu0 %v305
    %v437 = vpop.f32.mrf.mxu0
    %v438 = vadd.f32 0.0, %v437
    %v439 = vpop.f32.mrf.mxu0
    %v440 = vadd.f32 0.0, %v439
    %441 = vmatmul.bf16.gmra.mxu0 %v308
    %v442 = vpop.f32.mrf.mxu0
    %v443 = vadd.f32 0.0, %v442
    %v444 = vpop.f32.mrf.mxu0
    %v445 = vadd.f32 0.0, %v444
    %446 = vmatmul.bf16.gmra.mxu0 %v311
    %v447 = vpop.f32.mrf.mxu0
    %v448 = vadd.f32 0.0, %v447
    %v449 = vpop.f32.mrf.mxu0
    %v450 = vadd.f32 0.0, %v449
    %451 = vmatmul.bf16.gmra.mxu0 %v314
    %v452 = vpop.f32.mrf.mxu0
    %v453 = vadd.f32 0.0, %v452
    %v454 = vpop.f32.mrf.mxu0
    %v455 = vadd.f32 0.0, %v454
    %456 = vmatmul.bf16.gmra.mxu0 %v317
    %v457 = vpop.f32.mrf.mxu0
    %v458 = vadd.f32 0.0, %v457
    %v459 = vpop.f32.mrf.mxu0
    %v460 = vadd.f32 0.0, %v459
    %461 = vmatmul.bf16.gmra.mxu0 %v320
    %v462 = vpop.f32.mrf.mxu0
    %v463 = vadd.f32 0.0, %v462
    %v464 = vpop.f32.mrf.mxu0
    %v465 = vadd.f32 0.0, %v464
    %466 = vmatmul.bf16.gmra.mxu0 %v323
    %v467 = vpop.f32.mrf.mxu0
    %v468 = vadd.f32 0.0, %v467
    %v469 = vpop.f32.mrf.mxu0
    %v470 = vadd.f32 0.0, %v469
    %471 = vmatmul.bf16.gmra.mxu0 %v326
    %v472 = vpop.f32.mrf.mxu0
    %v473 = vadd.f32 0.0, %v472
    %v474 = vpop.f32.mrf.mxu0
    %v475 = vadd.f32 0.0, %v474
    %476 = vmatmul.bf16.gmra.mxu0 %v329
    %v477 = vpop.f32.mrf.mxu0
    %v478 = vadd.f32 0.0, %v477
    %v479 = vpop.f32.mrf.mxu0
    %v480 = vadd.f32 0.0, %v479
    %481 = vmatmul.bf16.gmra.mxu0 %v332
    %v482 = vpop.f32.mrf.mxu0
    %v483 = vadd.f32 0.0, %v482
    %v484 = vpop.f32.mrf.mxu0
    %v485 = vadd.f32 0.0, %v484
    %486 = vmatmul.bf16.gmra.mxu0 %v335
    %v487 = vpop.f32.mrf.mxu0
    %v488 = vadd.f32 0.0, %v487
    %v489 = vpop.f32.mrf.mxu0
    %v490 = vadd.f32 0.0, %v489
    %491 = vmatmul.bf16.gmra.mxu0 %v338
    %v492 = vpop.f32.mrf.mxu0
    %v493 = vadd.f32 0.0, %v492
    %v494 = vpop.f32.mrf.mxu0
    %v495 = vadd.f32 0.0, %v494
    %496 = vmatmul.bf16.gmra.mxu0 %v341
    %v497 = vpop.f32.mrf.mxu0
    %v498 = vadd.f32 0.0, %v497
    %v499 = vpop.f32.mrf.mxu0
    %v500 = vadd.f32 0.0, %v499
    %501 = vmatmul.bf16.gmra.mxu0 %v344
    %v502 = vpop.f32.mrf.mxu0
    %v503 = vadd.f32 0.0, %v502
    %v504 = vpop.f32.mrf.mxu0
    %v505 = vadd.f32 0.0, %v504
    %506 = vmatmul.bf16.gmra.mxu0 %v347
    %v507 = vpop.f32.mrf.mxu0
    %v508 = vadd.f32 0.0, %v507
    %v509 = vpop.f32.mrf.mxu0
    %v510 = vadd.f32 0.0, %v509
    %511 = vmatmul.bf16.gmra.mxu0 %v350
    %v512 = vpop.f32.mrf.mxu0
    %v513 = vadd.f32 0.0, %v512
    %v514 = vpop.f32.mrf.mxu0
    %v515 = vadd.f32 0.0, %v514
    %516 = vmatmul.bf16.gmra.mxu0 %v353
    %v517 = vpop.f32.mrf.mxu0
    %v518 = vadd.f32 0.0, %v517
    %v519 = vpop.f32.mrf.mxu0
    %v520 = vadd.f32 0.0, %v519
    %521 = vmatmul.bf16.gmra.mxu0 %v356
    %v522 = vpop.f32.mrf.mxu0
    %v523 = vadd.f32 0.0, %v522
    %v524 = vpop.f32.mrf.mxu0
    %v525 = vadd.f32 0.0, %v524
    %526 = vmatmul.bf16.gmra.mxu0 %v359
    %v527 = vpop.f32.mrf.mxu0
    %v528 = vadd.f32 0.0, %v527
    %v529 = vpop.f32.mrf.mxu0
    %v530 = vadd.f32 0.0, %v529
    %531 = vmatmul.bf16.gmra.mxu0 %v362
    %v532 = vpop.f32.mrf.mxu0
    %v533 = vadd.f32 0.0, %v532
    %v534 = vpop.f32.mrf.mxu0
    %v535 = vadd.f32 0.0, %v534
    %536 = vmatmul.bf16.gmra.mxu0 %v365
    %v537 = vpop.f32.mrf.mxu0
    %v538 = vadd.f32 0.0, %v537
    %v539 = vpop.f32.mrf.mxu0
    %v540 = vadd.f32 0.0, %v539
    %541 = vmatmul.bf16.gmra.mxu0 %v368
    %v542 = vpop.f32.mrf.mxu0
    %v543 = vadd.f32 0.0, %v542
    %v544 = vpop.f32.mrf.mxu0
    %v545 = vadd.f32 0.0, %v544
    %546 = vmatmul.bf16.gmra.mxu0 %v371
    %v547 = vpop.f32.mrf.mxu0
    %v548 = vadd.f32 0.0, %v547
    %v549 = vpop.f32.mrf.mxu0
    %v550 = vadd.f32 0.0, %v549
    %551 = vmatmul.bf16.gmra.mxu0 %v374
    %v552 = vpop.f32.mrf.mxu0
    %v553 = vadd.f32 0.0, %v552
    %v554 = vpop.f32.mrf.mxu0
    %v555 = vadd.f32 0.0, %v554
    %556 = vmatmul.bf16.gmra.mxu0 %v377
    %v557 = vpop.f32.mrf.mxu0
    %v558 = vadd.f32 0.0, %v557
    %v559 = vpop.f32.mrf.mxu0
    %v560 = vadd.f32 0.0, %v559
    %561 = vmatmul.bf16.gmra.mxu0 %v380
    %v562 = vpop.f32.mrf.mxu0
    %v563 = vadd.f32 0.0, %v562
    %v564 = vpop.f32.mrf.mxu0
    %v565 = vadd.f32 0.0, %v564
    %566 = vmatmul.bf16.gmra.mxu0 %v383
    %v567 = vpop.f32.mrf.mxu0
    %v568 = vadd.f32 0.0, %v567
    %v569 = vpop.f32.mrf.mxu0
    %v570 = vadd.f32 0.0, %v569
    %571 = vmatmul.bf16.gmra.mxu0 %v386
    %v572 = vpop.f32.mrf.mxu0
    %v573 = vadd.f32 0.0, %v572
    %v574 = vpop.f32.mrf.mxu0
    %v575 = vadd.f32 0.0, %v574
    %576 = vmatmul.bf16.gmra.mxu0 %v389
    %v577 = vpop.f32.mrf.mxu0
    %v578 = vadd.f32 0.0, %v577
    %v579 = vpop.f32.mrf.mxu0
    %v580 = vadd.f32 0.0, %v579
    %581 = vmatmul.bf16.gmra.mxu0 %v392
    %v582 = vpop.f32.mrf.mxu0
    %v583 = vadd.f32 0.0, %v582
    %v584 = vpop.f32.mrf.mxu0
    %v585 = vadd.f32 0.0, %v584
    %586 = vmatmul.bf16.gmra.mxu0 %v395
    %v587 = vpop.f32.mrf.mxu0
    %v588 = vadd.f32 0.0, %v587
    %v589 = vpop.f32.mrf.mxu0
    %v590 = vadd.f32 0.0, %v589
    %591 = vmatmul.bf16.gmra.mxu0 %v398
    %v592 = vpop.f32.mrf.mxu0
    %v593 = vadd.f32 0.0, %v592
    %v594 = vpop.f32.mrf.mxu0
    %v595 = vadd.f32 0.0, %v594
    %596 = vmatmul.bf16.gmra.mxu0 %v401
    %v597 = vpop.f32.mrf.mxu0
    %v598 = vadd.f32 0.0, %v597
    %v599 = vpop.f32.mrf.mxu0
    %v600 = vadd.f32 0.0, %v599
    %601 = vmatmul.bf16.gmra.mxu0 %v404
    %v602 = vpop.f32.mrf.mxu0
    %v603 = vadd.f32 0.0, %v602
    %v604 = vpop.f32.mrf.mxu0
    %v605 = vadd.f32 0.0, %v604
    %606 = vmatmul.bf16.gmra.mxu0 %v407
    %v607 = vpop.f32.mrf.mxu0
    %v608 = vadd.f32 0.0, %v607
    %v609 = vpop.f32.mrf.mxu0
    %v610 = vadd.f32 0.0, %v609
    %611 = vmatmul.bf16.gmra.mxu0 %v410
    %v612 = vpop.f32.mrf.mxu0
    %v613 = vadd.f32 0.0, %v612
    %v614 = vpop.f32.mrf.mxu0
    %v615 = vadd.f32 0.0, %v614
    %616 = vmatmul.bf16.gmra.mxu0 %v413
    %v617 = vpop.f32.mrf.mxu0
    %v618 = vadd.f32 0.0, %v617
    %v619 = vpop.f32.mrf.mxu0
    %v620 = vadd.f32 0.0, %v619
    %621 = vmatmul.bf16.gmra.mxu0 %v416
    %v622 = vpop.f32.mrf.mxu0
    %v623 = vadd.f32 0.0, %v622
    %v624 = vpop.f32.mrf.mxu0
    %v625 = vadd.f32 0.0, %v624
    %626 = vmatmul.bf16.gmra.mxu0 %v419
    %v627 = vpop.f32.mrf.mxu0
    %v628 = vadd.f32 0.0, %v627
    %v629 = vpop.f32.mrf.mxu0
    %v630 = vadd.f32 0.0, %v629
    %631 = vmatmul.bf16.gmra.mxu0 %v422
    %v632 = vpop.f32.mrf.mxu0
    %v633 = vadd.f32 0.0, %v632
    %v634 = vpop.f32.mrf.mxu0
    %v635 = vadd.f32 0.0, %v634
    %636 = vdwg.mxu0
    %s637 = smul.u32 0, 640
    %v638 = vlaneseq
    %v639 = vshrl.u32 %v638, 7
    %v640 = vadd.s32 %v639, 8
    %v641 = vadd.s32 %v639, 16
    %v642 = vadd.s32 %v639, 24
    %v643 = vadd.s32 %v639, 32
    %v644 = vadd.s32 %v639, 40
    %v645 = vadd.s32 %v639, 48
    %v646 = vadd.s32 %v639, 56
    %v647 = vadd.s32 %v639, 64
    %v648 = vadd.s32 %v639, 72
    %v649 = vadd.s32 %v639, 80
    %v650 = vadd.s32 %v639, 88
    %v651 = vadd.s32 %v639, 96
    %v652 = vadd.s32 %v639, 104
    %v653 = vadd.s32 %v639, 112
    %v654 = vadd.s32 %v639, 120
    %v655 = vadd.s32 %v639, 128
    %v656 = vadd.s32 %v639, 136
    %v657 = vadd.s32 %v639, 144
    %v658 = vadd.s32 %v639, 152
    %v659 = vadd.s32 %v639, 160
    %v660 = vadd.s32 %v639, 168
    %v661 = vadd.s32 %v639, 176
    %v662 = vadd.s32 %v639, 184
    %v663 = vadd.s32 %v639, 192
    %v664 = vadd.s32 %v639, 200
    %v665 = vadd.s32 %v639, 208
    %v666 = vadd.s32 %v639, 216
    %v667 = vadd.s32 %v639, 224
    %v668 = vadd.s32 %v639, 232
    %v669 = vadd.s32 %v639, 240
    %v670 = vadd.s32 %v639, 248
    %v671 = vadd.s32 %v639, 256
    %v672 = vadd.s32 %v639, 264
    %v673 = vadd.s32 %v639, 272
    %v674 = vadd.s32 %v639, 280
    %v675 = vadd.s32 %v639, 288
    %v676 = vadd.s32 %v639, 296
    %v677 = vadd.s32 %v639, 304
    %v678 = vadd.s32 %v639, 312
    %v679 = vadd.s32 %v639, 320
    %v680 = vadd.s32 %v639, 328
    %v681 = vadd.s32 %v639, 336
    %v682 = vadd.s32 %v639, 344
    %v683 = vadd.s32 %v639, 352
    %v684 = vadd.s32 %v639, 360
    %v685 = vadd.s32 %v639, 368
    %v686 = vadd.s32 %v639, 376
    %v687 = vadd.s32 %v639, 384
    %v688 = vadd.s32 %v639, 392
    %v689 = vadd.s32 %v639, 400
    %v690 = vadd.s32 %v639, 408
    %v691 = vadd.s32 %v639, 416
    %v692 = vadd.s32 %v639, 424
    %v693 = vadd.s32 %v639, 432
    %v694 = vadd.s32 %v639, 440
    %v695 = vadd.s32 %v639, 448
    %v696 = vadd.s32 %v639, 456
    %v697 = vadd.s32 %v639, 464
    %v698 = vadd.s32 %v639, 472
    %v699 = vadd.s32 %v639, 480
    %v700 = vadd.s32 %v639, 488
    %v701 = vadd.s32 %v639, 496
    %v702 = vadd.s32 %v639, 504
    %v703 = vadd.s32 %v639, 512
    %v704 = vadd.s32 %v639, 520
    %v705 = vadd.s32 %v639, 528
    %v706 = vadd.s32 %v639, 536
    %v707 = vadd.s32 %v639, 544
    %v708 = vadd.s32 %v639, 552
    %v709 = vadd.s32 %v639, 560
    %v710 = vadd.s32 %v639, 568
    %v711 = vadd.s32 %v639, 576
    %v712 = vadd.s32 %v639, 584
    %v713 = vadd.s32 %v639, 592
    %v714 = vadd.s32 %v639, 600
    %v715 = vadd.s32 %v639, 608
    %v716 = vadd.s32 %v639, 616
    %v717 = vadd.s32 %v639, 624
    %v718 = vadd.s32 %v639, 632
    %v719 = vstv %s637
    %v720 = vadd.s32 %v639, %v719
    %v721 = vadd.s32 %v640, %v719
    %v722 = vadd.s32 %v641, %v719
    %v723 = vadd.s32 %v642, %v719
    %v724 = vadd.s32 %v643, %v719
    %v725 = vadd.s32 %v644, %v719
    %v726 = vadd.s32 %v645, %v719
    %v727 = vadd.s32 %v646, %v719
    %v728 = vadd.s32 %v647, %v719
    %v729 = vadd.s32 %v648, %v719
    %v730 = vadd.s32 %v649, %v719
    %v731 = vadd.s32 %v650, %v719
    %v732 = vadd.s32 %v651, %v719
    %v733 = vadd.s32 %v652, %v719
    %v734 = vadd.s32 %v653, %v719
    %v735 = vadd.s32 %v654, %v719
    %v736 = vadd.s32 %v655, %v719
    %v737 = vadd.s32 %v656, %v719
    %v738 = vadd.s32 %v657, %v719
    %v739 = vadd.s32 %v658, %v719
    %v740 = vadd.s32 %v659, %v719
    %v741 = vadd.s32 %v660, %v719
    %v742 = vadd.s32 %v661, %v719
    %v743 = vadd.s32 %v662, %v719
    %v744 = vadd.s32 %v663, %v719
    %v745 = vadd.s32 %v664, %v719
    %v746 = vadd.s32 %v665, %v719
    %v747 = vadd.s32 %v666, %v719
    %v748 = vadd.s32 %v667, %v719
    %v749 = vadd.s32 %v668, %v719
    %v750 = vadd.s32 %v669, %v719
    %v751 = vadd.s32 %v670, %v719
    %v752 = vadd.s32 %v671, %v719
    %v753 = vadd.s32 %v672, %v719
    %v754 = vadd.s32 %v673, %v719
    %v755 = vadd.s32 %v674, %v719
    %v756 = vadd.s32 %v675, %v719
    %v757 = vadd.s32 %v676, %v719
    %v758 = vadd.s32 %v677, %v719
    %v759 = vadd.s32 %v678, %v719
    %v760 = vadd.s32 %v679, %v719
    %v761 = vadd.s32 %v680, %v719
    %v762 = vadd.s32 %v681, %v719
    %v763 = vadd.s32 %v682, %v719
    %v764 = vadd.s32 %v683, %v719
    %v765 = vadd.s32 %v684, %v719
    %v766 = vadd.s32 %v685, %v719
    %v767 = vadd.s32 %v686, %v719
    %v768 = vadd.s32 %v687, %v719
    %v769 = vadd.s32 %v688, %v719
    %v770 = vadd.s32 %v689, %v719
    %v771 = vadd.s32 %v690, %v719
    %v772 = vadd.s32 %v691, %v719
    %v773 = vadd.s32 %v692, %v719
    %v774 = vadd.s32 %v693, %v719
    %v775 = vadd.s32 %v694, %v719
    %v776 = vadd.s32 %v695, %v719
    %v777 = vadd.s32 %v696, %v719
    %v778 = vadd.s32 %v697, %v719
    %v779 = vadd.s32 %v698, %v719
    %v780 = vadd.s32 %v699, %v719
    %v781 = vadd.s32 %v700, %v719
    %v782 = vadd.s32 %v701, %v719
    %v783 = vadd.s32 %v702, %v719
    %v784 = vadd.s32 %v703, %v719
    %v785 = vadd.s32 %v704, %v719
    %v786 = vadd.s32 %v705, %v719
    %v787 = vadd.s32 %v706, %v719
    %v788 = vadd.s32 %v707, %v719
    %v789 = vadd.s32 %v708, %v719
    %v790 = vadd.s32 %v709, %v719
    %v791 = vadd.s32 %v710, %v719
    %v792 = vadd.s32 %v711, %v719
    %v793 = vadd.s32 %v712, %v719
    %v794 = vadd.s32 %v713, %v719
    %v795 = vadd.s32 %v714, %v719
    %v796 = vadd.s32 %v715, %v719
    %v797 = vadd.s32 %v716, %v719
    %v798 = vadd.s32 %v717, %v719
    %v799 = vadd.s32 %v718, %v719
    %vm800 = vcmp.lt.s32.totalorder %v720, 640
    %vm801 = vcmp.lt.s32.totalorder %v721, 640
    %vm802 = vcmp.lt.s32.totalorder %v722, 640
    %vm803 = vcmp.lt.s32.totalorder %v723, 640
    %vm804 = vcmp.lt.s32.totalorder %v724, 640
    %vm805 = vcmp.lt.s32.totalorder %v725, 640
    %vm806 = vcmp.lt.s32.totalorder %v726, 640
    %vm807 = vcmp.lt.s32.totalorder %v727, 640
    %vm808 = vcmp.lt.s32.totalorder %v728, 640
    %vm809 = vcmp.lt.s32.totalorder %v729, 640
    %vm810 = vcmp.lt.s32.totalorder %v730, 640
    %vm811 = vcmp.lt.s32.totalorder %v731, 640
    %vm812 = vcmp.lt.s32.totalorder %v732, 640
    %vm813 = vcmp.lt.s32.totalorder %v733, 640
    %vm814 = vcmp.lt.s32.totalorder %v734, 640
    %vm815 = vcmp.lt.s32.totalorder %v735, 640
    %vm816 = vcmp.lt.s32.totalorder %v736, 640
    %vm817 = vcmp.lt.s32.totalorder %v737, 640
    %vm818 = vcmp.lt.s32.totalorder %v738, 640
    %vm819 = vcmp.lt.s32.totalorder %v739, 640
    %vm820 = vcmp.lt.s32.totalorder %v740, 640
    %vm821 = vcmp.lt.s32.totalorder %v741, 640
    %vm822 = vcmp.lt.s32.totalorder %v742, 640
    %vm823 = vcmp.lt.s32.totalorder %v743, 640
    %vm824 = vcmp.lt.s32.totalorder %v744, 640
    %vm825 = vcmp.lt.s32.totalorder %v745, 640
    %vm826 = vcmp.lt.s32.totalorder %v746, 640
    %vm827 = vcmp.lt.s32.totalorder %v747, 640
    %vm828 = vcmp.lt.s32.totalorder %v748, 640
    %vm829 = vcmp.lt.s32.totalorder %v749, 640
    %vm830 = vcmp.lt.s32.totalorder %v750, 640
    %vm831 = vcmp.lt.s32.totalorder %v751, 640
    %vm832 = vcmp.lt.s32.totalorder %v752, 640
    %vm833 = vcmp.lt.s32.totalorder %v753, 640
    %vm834 = vcmp.lt.s32.totalorder %v754, 640
    %vm835 = vcmp.lt.s32.totalorder %v755, 640
    %vm836 = vcmp.lt.s32.totalorder %v756, 640
    %vm837 = vcmp.lt.s32.totalorder %v757, 640
    %vm838 = vcmp.lt.s32.totalorder %v758, 640
    %vm839 = vcmp.lt.s32.totalorder %v759, 640
    %vm840 = vcmp.lt.s32.totalorder %v760, 640
    %vm841 = vcmp.lt.s32.totalorder %v761, 640
    %vm842 = vcmp.lt.s32.totalorder %v762, 640
    %vm843 = vcmp.lt.s32.totalorder %v763, 640
    %vm844 = vcmp.lt.s32.totalorder %v764, 640
    %vm845 = vcmp.lt.s32.totalorder %v765, 640
    %vm846 = vcmp.lt.s32.totalorder %v766, 640
    %vm847 = vcmp.lt.s32.totalorder %v767, 640
    %vm848 = vcmp.lt.s32.totalorder %v768, 640
    %vm849 = vcmp.lt.s32.totalorder %v769, 640
    %vm850 = vcmp.lt.s32.totalorder %v770, 640
    %vm851 = vcmp.lt.s32.totalorder %v771, 640
    %vm852 = vcmp.lt.s32.totalorder %v772, 640
    %vm853 = vcmp.lt.s32.totalorder %v773, 640
    %vm854 = vcmp.lt.s32.totalorder %v774, 640
    %vm855 = vcmp.lt.s32.totalorder %v775, 640
    %vm856 = vcmp.lt.s32.totalorder %v776, 640
    %vm857 = vcmp.lt.s32.totalorder %v777, 640
    %vm858 = vcmp.lt.s32.totalorder %v778, 640
    %vm859 = vcmp.lt.s32.totalorder %v779, 640
    %vm860 = vcmp.lt.s32.totalorder %v780, 640
    %vm861 = vcmp.lt.s32.totalorder %v781, 640
    %vm862 = vcmp.lt.s32.totalorder %v782, 640
    %vm863 = vcmp.lt.s32.totalorder %v783, 640
    %vm864 = vcmp.lt.s32.totalorder %v784, 640
    %vm865 = vcmp.lt.s32.totalorder %v785, 640
    %vm866 = vcmp.lt.s32.totalorder %v786, 640
    %vm867 = vcmp.lt.s32.totalorder %v787, 640
    %vm868 = vcmp.lt.s32.totalorder %v788, 640
    %vm869 = vcmp.lt.s32.totalorder %v789, 640
    %vm870 = vcmp.lt.s32.totalorder %v790, 640
    %vm871 = vcmp.lt.s32.totalorder %v791, 640
    %vm872 = vcmp.lt.s32.totalorder %v792, 640
    %vm873 = vcmp.lt.s32.totalorder %v793, 640
    %vm874 = vcmp.lt.s32.totalorder %v794, 640
    %vm875 = vcmp.lt.s32.totalorder %v795, 640
    %vm876 = vcmp.lt.s32.totalorder %v796, 640
    %vm877 = vcmp.lt.s32.totalorder %v797, 640
    %vm878 = vcmp.lt.s32.totalorder %v798, 640
    %vm879 = vcmp.lt.s32.totalorder %v799, 640
    %v880 = vsel %vm800, 1, 0
    %v881 = vsel %vm801, 1, 0
    %v882 = vsel %vm802, 1, 0
    %v883 = vsel %vm803, 1, 0
    %v884 = vsel %vm804, 1, 0
    %v885 = vsel %vm805, 1, 0
    %v886 = vsel %vm806, 1, 0
    %v887 = vsel %vm807, 1, 0
    %v888 = vsel %vm808, 1, 0
    %v889 = vsel %vm809, 1, 0
    %v890 = vsel %vm810, 1, 0
    %v891 = vsel %vm811, 1, 0
    %v892 = vsel %vm812, 1, 0
    %v893 = vsel %vm813, 1, 0
    %v894 = vsel %vm814, 1, 0
    %v895 = vsel %vm815, 1, 0
    %v896 = vsel %vm816, 1, 0
    %v897 = vsel %vm817, 1, 0
    %v898 = vsel %vm818, 1, 0
    %v899 = vsel %vm819, 1, 0
    %v900 = vsel %vm820, 1, 0
    %v901 = vsel %vm821, 1, 0
    %v902 = vsel %vm822, 1, 0
    %v903 = vsel %vm823, 1, 0
    %v904 = vsel %vm824, 1, 0
    %v905 = vsel %vm825, 1, 0
    %v906 = vsel %vm826, 1, 0
    %v907 = vsel %vm827, 1, 0
    %v908 = vsel %vm828, 1, 0
    %v909 = vsel %vm829, 1, 0
    %v910 = vsel %vm830, 1, 0
    %v911 = vsel %vm831, 1, 0
    %v912 = vsel %vm832, 1, 0
    %v913 = vsel %vm833, 1, 0
    %v914 = vsel %vm834, 1, 0
    %v915 = vsel %vm835, 1, 0
    %v916 = vsel %vm836, 1, 0
    %v917 = vsel %vm837, 1, 0
    %v918 = vsel %vm838, 1, 0
    %v919 = vsel %vm839, 1, 0
    %v920 = vsel %vm840, 1, 0
    %v921 = vsel %vm841, 1, 0
    %v922 = vsel %vm842, 1, 0
    %v923 = vsel %vm843, 1, 0
    %v924 = vsel %vm844, 1, 0
    %v925 = vsel %vm845, 1, 0
    %v926 = vsel %vm846, 1, 0
    %v927 = vsel %vm847, 1, 0
    %v928 = vsel %vm848, 1, 0
    %v929 = vsel %vm849, 1, 0
    %v930 = vsel %vm850, 1, 0
    %v931 = vsel %vm851, 1, 0
    %v932 = vsel %vm852, 1, 0
    %v933 = vsel %vm853, 1, 0
    %v934 = vsel %vm854, 1, 0
    %v935 = vsel %vm855, 1, 0
    %v936 = vsel %vm856, 1, 0
    %v937 = vsel %vm857, 1, 0
    %v938 = vsel %vm858, 1, 0
    %v939 = vsel %vm859, 1, 0
    %v940 = vsel %vm860, 1, 0
    %v941 = vsel %vm861, 1, 0
    %v942 = vsel %vm862, 1, 0
    %v943 = vsel %vm863, 1, 0
    %v944 = vsel %vm864, 1, 0
    %v945 = vsel %vm865, 1, 0
    %v946 = vsel %vm866, 1, 0
    %v947 = vsel %vm867, 1, 0
    %v948 = vsel %vm868, 1, 0
    %v949 = vsel %vm869, 1, 0
    %v950 = vsel %vm870, 1, 0
    %v951 = vsel %vm871, 1, 0
    %v952 = vsel %vm872, 1, 0
    %v953 = vsel %vm873, 1, 0
    %v954 = vsel %vm874, 1, 0
    %v955 = vsel %vm875, 1, 0
    %v956 = vsel %vm876, 1, 0
    %v957 = vsel %vm877, 1, 0
    %v958 = vsel %vm878, 1, 0
    %v959 = vsel %vm879, 1, 0
    %vm960 = vcmp.eq.s32.totalorder %v880, 1
    %vm961 = vcmp.eq.s32.totalorder %v881, 1
    %vm962 = vcmp.eq.s32.totalorder %v882, 1
    %vm963 = vcmp.eq.s32.totalorder %v883, 1
    %vm964 = vcmp.eq.s32.totalorder %v884, 1
    %vm965 = vcmp.eq.s32.totalorder %v885, 1
    %vm966 = vcmp.eq.s32.totalorder %v886, 1
    %vm967 = vcmp.eq.s32.totalorder %v887, 1
    %vm968 = vcmp.eq.s32.totalorder %v888, 1
    %vm969 = vcmp.eq.s32.totalorder %v889, 1
    %vm970 = vcmp.eq.s32.totalorder %v890, 1
    %vm971 = vcmp.eq.s32.totalorder %v891, 1
    %vm972 = vcmp.eq.s32.totalorder %v892, 1
    %vm973 = vcmp.eq.s32.totalorder %v893, 1
    %vm974 = vcmp.eq.s32.totalorder %v894, 1
    %vm975 = vcmp.eq.s32.totalorder %v895, 1
    %vm976 = vcmp.eq.s32.totalorder %v896, 1
    %vm977 = vcmp.eq.s32.totalorder %v897, 1
    %vm978 = vcmp.eq.s32.totalorder %v898, 1
    %vm979 = vcmp.eq.s32.totalorder %v899, 1
    %vm980 = vcmp.eq.s32.totalorder %v900, 1
    %vm981 = vcmp.eq.s32.totalorder %v901, 1
    %vm982 = vcmp.eq.s32.totalorder %v902, 1
    %vm983 = vcmp.eq.s32.totalorder %v903, 1
    %vm984 = vcmp.eq.s32.totalorder %v904, 1
    %vm985 = vcmp.eq.s32.totalorder %v905, 1
    %vm986 = vcmp.eq.s32.totalorder %v906, 1
    %vm987 = vcmp.eq.s32.totalorder %v907, 1
    %vm988 = vcmp.eq.s32.totalorder %v908, 1
    %vm989 = vcmp.eq.s32.totalorder %v909, 1
    %vm990 = vcmp.eq.s32.totalorder %v910, 1
    %vm991 = vcmp.eq.s32.totalorder %v911, 1
    %vm992 = vcmp.eq.s32.totalorder %v912, 1
    %vm993 = vcmp.eq.s32.totalorder %v913, 1
    %vm994 = vcmp.eq.s32.totalorder %v914, 1
    %vm995 = vcmp.eq.s32.totalorder %v915, 1
    %vm996 = vcmp.eq.s32.totalorder %v916, 1
    %vm997 = vcmp.eq.s32.totalorder %v917, 1
    %vm998 = vcmp.eq.s32.totalorder %v918, 1
    %vm999 = vcmp.eq.s32.totalorder %v919, 1
    %vm1000 = vcmp.eq.s32.totalorder %v920, 1
    %vm1001 = vcmp.eq.s32.totalorder %v921, 1
    %vm1002 = vcmp.eq.s32.totalorder %v922, 1
    %vm1003 = vcmp.eq.s32.totalorder %v923, 1
    %vm1004 = vcmp.eq.s32.totalorder %v924, 1
    %vm1005 = vcmp.eq.s32.totalorder %v925, 1
    %vm1006 = vcmp.eq.s32.totalorder %v926, 1
    %vm1007 = vcmp.eq.s32.totalorder %v927, 1
    %vm1008 = vcmp.eq.s32.totalorder %v928, 1
    %vm1009 = vcmp.eq.s32.totalorder %v929, 1
    %vm1010 = vcmp.eq.s32.totalorder %v930, 1
    %vm1011 = vcmp.eq.s32.totalorder %v931, 1
    %vm1012 = vcmp.eq.s32.totalorder %v932, 1
    %vm1013 = vcmp.eq.s32.totalorder %v933, 1
    %vm1014 = vcmp.eq.s32.totalorder %v934, 1
    %vm1015 = vcmp.eq.s32.totalorder %v935, 1
    %vm1016 = vcmp.eq.s32.totalorder %v936, 1
    %vm1017 = vcmp.eq.s32.totalorder %v937, 1
    %vm1018 = vcmp.eq.s32.totalorder %v938, 1
    %vm1019 = vcmp.eq.s32.totalorder %v939, 1
    %vm1020 = vcmp.eq.s32.totalorder %v940, 1
    %vm1021 = vcmp.eq.s32.totalorder %v941, 1
    %vm1022 = vcmp.eq.s32.totalorder %v942, 1
    %vm1023 = vcmp.eq.s32.totalorder %v943, 1
    %vm1024 = vcmp.eq.s32.totalorder %v944, 1
    %vm1025 = vcmp.eq.s32.totalorder %v945, 1
    %vm1026 = vcmp.eq.s32.totalorder %v946, 1
    %vm1027 = vcmp.eq.s32.totalorder %v947, 1
    %vm1028 = vcmp.eq.s32.totalorder %v948, 1
    %vm1029 = vcmp.eq.s32.totalorder %v949, 1
    %vm1030 = vcmp.eq.s32.totalorder %v950, 1
    %vm1031 = vcmp.eq.s32.totalorder %v951, 1
    %vm1032 = vcmp.eq.s32.totalorder %v952, 1
    %vm1033 = vcmp.eq.s32.totalorder %v953, 1
    %vm1034 = vcmp.eq.s32.totalorder %v954, 1
    %vm1035 = vcmp.eq.s32.totalorder %v955, 1
    %vm1036 = vcmp.eq.s32.totalorder %v956, 1
    %vm1037 = vcmp.eq.s32.totalorder %v957, 1
    %vm1038 = vcmp.eq.s32.totalorder %v958, 1
    %vm1039 = vcmp.eq.s32.totalorder %v959, 1
    %v1040 = vsel %vm960, %v438, 0.0
    %v1041 = vsel %vm961, %v440, 0.0
    %v1042 = vsel %vm962, %v443, 0.0
    %v1043 = vsel %vm963, %v445, 0.0
    %v1044 = vsel %vm964, %v448, 0.0
    %v1045 = vsel %vm965, %v450, 0.0
    %v1046 = vsel %vm966, %v453, 0.0
    %v1047 = vsel %vm967, %v455, 0.0
    %v1048 = vsel %vm968, %v458, 0.0
    %v1049 = vsel %vm969, %v460, 0.0
    %v1050 = vsel %vm970, %v463, 0.0
    %v1051 = vsel %vm971, %v465, 0.0
    %v1052 = vsel %vm972, %v468, 0.0
    %v1053 = vsel %vm973, %v470, 0.0
    %v1054 = vsel %vm974, %v473, 0.0
    %v1055 = vsel %vm975, %v475, 0.0
    %v1056 = vsel %vm976, %v478, 0.0
    %v1057 = vsel %vm977, %v480, 0.0
    %v1058 = vsel %vm978, %v483, 0.0
    %v1059 = vsel %vm979, %v485, 0.0
    %v1060 = vsel %vm980, %v488, 0.0
    %v1061 = vsel %vm981, %v490, 0.0
    %v1062 = vsel %vm982, %v493, 0.0
    %v1063 = vsel %vm983, %v495, 0.0
    %v1064 = vsel %vm984, %v498, 0.0
    %v1065 = vsel %vm985, %v500, 0.0
    %v1066 = vsel %vm986, %v503, 0.0
    %v1067 = vsel %vm987, %v505, 0.0
    %v1068 = vsel %vm988, %v508, 0.0
    %v1069 = vsel %vm989, %v510, 0.0
    %v1070 = vsel %vm990, %v513, 0.0
    %v1071 = vsel %vm991, %v515, 0.0
    %v1072 = vsel %vm992, %v518, 0.0
    %v1073 = vsel %vm993, %v520, 0.0
    %v1074 = vsel %vm994, %v523, 0.0
    %v1075 = vsel %vm995, %v525, 0.0
    %v1076 = vsel %vm996, %v528, 0.0
    %v1077 = vsel %vm997, %v530, 0.0
    %v1078 = vsel %vm998, %v533, 0.0
    %v1079 = vsel %vm999, %v535, 0.0
    %v1080 = vsel %vm1000, %v538, 0.0
    %v1081 = vsel %vm1001, %v540, 0.0
    %v1082 = vsel %vm1002, %v543, 0.0
    %v1083 = vsel %vm1003, %v545, 0.0
    %v1084 = vsel %vm1004, %v548, 0.0
    %v1085 = vsel %vm1005, %v550, 0.0
    %v1086 = vsel %vm1006, %v553, 0.0
    %v1087 = vsel %vm1007, %v555, 0.0
    %v1088 = vsel %vm1008, %v558, 0.0
    %v1089 = vsel %vm1009, %v560, 0.0
    %v1090 = vsel %vm1010, %v563, 0.0
    %v1091 = vsel %vm1011, %v565, 0.0
    %v1092 = vsel %vm1012, %v568, 0.0
    %v1093 = vsel %vm1013, %v570, 0.0
    %v1094 = vsel %vm1014, %v573, 0.0
    %v1095 = vsel %vm1015, %v575, 0.0
    %v1096 = vsel %vm1016, %v578, 0.0
    %v1097 = vsel %vm1017, %v580, 0.0
    %v1098 = vsel %vm1018, %v583, 0.0
    %v1099 = vsel %vm1019, %v585, 0.0
    %v1100 = vsel %vm1020, %v588, 0.0
    %v1101 = vsel %vm1021, %v590, 0.0
    %v1102 = vsel %vm1022, %v593, 0.0
    %v1103 = vsel %vm1023, %v595, 0.0
    %v1104 = vsel %vm1024, %v598, 0.0
    %v1105 = vsel %vm1025, %v600, 0.0
    %v1106 = vsel %vm1026, %v603, 0.0
    %v1107 = vsel %vm1027, %v605, 0.0
    %v1108 = vsel %vm1028, %v608, 0.0
    %v1109 = vsel %vm1029, %v610, 0.0
    %v1110 = vsel %vm1030, %v613, 0.0
    %v1111 = vsel %vm1031, %v615, 0.0
    %v1112 = vsel %vm1032, %v618, 0.0
    %v1113 = vsel %vm1033, %v620, 0.0
    %v1114 = vsel %vm1034, %v623, 0.0
    %v1115 = vsel %vm1035, %v625, 0.0
    %v1116 = vsel %vm1036, %v628, 0.0
    %v1117 = vsel %vm1037, %v630, 0.0
    %v1118 = vsel %vm1038, %v633, 0.0
    %v1119 = vsel %vm1039, %v635, 0.0
    %vm1120 = vcmask 261120
    %v1121 = vsel %vm1120, %v1040, 0.0
    %v1122 = vsel %vm1120, %v1041, 0.0
    %v1123 = vadd.f32 %v1121, %v1122
    %v1124 = vsel %vm1120, %v1042, 0.0
    %v1125 = vadd.f32 %v1123, %v1124
    %v1126 = vsel %vm1120, %v1043, 0.0
    %v1127 = vadd.f32 %v1125, %v1126
    %v1128 = vsel %vm1120, %v1044, 0.0
    %v1129 = vadd.f32 %v1127, %v1128
    %v1130 = vsel %vm1120, %v1045, 0.0
    %v1131 = vadd.f32 %v1129, %v1130
    %v1132 = vsel %vm1120, %v1046, 0.0
    %v1133 = vadd.f32 %v1131, %v1132
    %v1134 = vsel %vm1120, %v1047, 0.0
    %v1135 = vadd.f32 %v1133, %v1134
    %v1136 = vsel %vm1120, %v1048, 0.0
    %v1137 = vadd.f32 %v1135, %v1136
    %v1138 = vsel %vm1120, %v1049, 0.0
    %v1139 = vadd.f32 %v1137, %v1138
    %v1140 = vsel %vm1120, %v1050, 0.0
    %v1141 = vadd.f32 %v1139, %v1140
    %v1142 = vsel %vm1120, %v1051, 0.0
    %v1143 = vadd.f32 %v1141, %v1142
    %v1144 = vsel %vm1120, %v1052, 0.0
    %v1145 = vadd.f32 %v1143, %v1144
    %v1146 = vsel %vm1120, %v1053, 0.0
    %v1147 = vadd.f32 %v1145, %v1146
    %v1148 = vsel %vm1120, %v1054, 0.0
    %v1149 = vadd.f32 %v1147, %v1148
    %v1150 = vsel %vm1120, %v1055, 0.0
    %v1151 = vadd.f32 %v1149, %v1150
    %v1152 = vsel %vm1120, %v1056, 0.0
    %v1153 = vadd.f32 %v1151, %v1152
    %v1154 = vsel %vm1120, %v1057, 0.0
    %v1155 = vadd.f32 %v1153, %v1154
    %v1156 = vsel %vm1120, %v1058, 0.0
    %v1157 = vadd.f32 %v1155, %v1156
    %v1158 = vsel %vm1120, %v1059, 0.0
    %v1159 = vadd.f32 %v1157, %v1158
    %v1160 = vsel %vm1120, %v1060, 0.0
    %v1161 = vadd.f32 %v1159, %v1160
    %v1162 = vsel %vm1120, %v1061, 0.0
    %v1163 = vadd.f32 %v1161, %v1162
    %v1164 = vsel %vm1120, %v1062, 0.0
    %v1165 = vadd.f32 %v1163, %v1164
    %v1166 = vsel %vm1120, %v1063, 0.0
    %v1167 = vadd.f32 %v1165, %v1166
    %v1168 = vsel %vm1120, %v1064, 0.0
    %v1169 = vadd.f32 %v1167, %v1168
    %v1170 = vsel %vm1120, %v1065, 0.0
    %v1171 = vadd.f32 %v1169, %v1170
    %v1172 = vsel %vm1120, %v1066, 0.0
    %v1173 = vadd.f32 %v1171, %v1172
    %v1174 = vsel %vm1120, %v1067, 0.0
    %v1175 = vadd.f32 %v1173, %v1174
    %v1176 = vsel %vm1120, %v1068, 0.0
    %v1177 = vadd.f32 %v1175, %v1176
    %v1178 = vsel %vm1120, %v1069, 0.0
    %v1179 = vadd.f32 %v1177, %v1178
    %v1180 = vsel %vm1120, %v1070, 0.0
    %v1181 = vadd.f32 %v1179, %v1180
    %v1182 = vsel %vm1120, %v1071, 0.0
    %v1183 = vadd.f32 %v1181, %v1182
    %v1184 = vsel %vm1120, %v1072, 0.0
    %v1185 = vadd.f32 %v1183, %v1184
    %v1186 = vsel %vm1120, %v1073, 0.0
    %v1187 = vadd.f32 %v1185, %v1186
    %v1188 = vsel %vm1120, %v1074, 0.0
    %v1189 = vadd.f32 %v1187, %v1188
    %v1190 = vsel %vm1120, %v1075, 0.0
    %v1191 = vadd.f32 %v1189, %v1190
    %v1192 = vsel %vm1120, %v1076, 0.0
    %v1193 = vadd.f32 %v1191, %v1192
    %v1194 = vsel %vm1120, %v1077, 0.0
    %v1195 = vadd.f32 %v1193, %v1194
    %v1196 = vsel %vm1120, %v1078, 0.0
    %v1197 = vadd.f32 %v1195, %v1196
    %v1198 = vsel %vm1120, %v1079, 0.0
    %v1199 = vadd.f32 %v1197, %v1198
    %v1200 = vsel %vm1120, %v1080, 0.0
    %v1201 = vadd.f32 %v1199, %v1200
    %v1202 = vsel %vm1120, %v1081, 0.0
    %v1203 = vadd.f32 %v1201, %v1202
    %v1204 = vsel %vm1120, %v1082, 0.0
    %v1205 = vadd.f32 %v1203, %v1204
    %v1206 = vsel %vm1120, %v1083, 0.0
    %v1207 = vadd.f32 %v1205, %v1206
    %v1208 = vsel %vm1120, %v1084, 0.0
    %v1209 = vadd.f32 %v1207, %v1208
    %v1210 = vsel %vm1120, %v1085, 0.0
    %v1211 = vadd.f32 %v1209, %v1210
    %v1212 = vsel %vm1120, %v1086, 0.0
    %v1213 = vadd.f32 %v1211, %v1212
    %v1214 = vsel %vm1120, %v1087, 0.0
    %v1215 = vadd.f32 %v1213, %v1214
    %v1216 = vsel %vm1120, %v1088, 0.0
    %v1217 = vadd.f32 %v1215, %v1216
    %v1218 = vsel %vm1120, %v1089, 0.0
    %v1219 = vadd.f32 %v1217, %v1218
    %v1220 = vsel %vm1120, %v1090, 0.0
    %v1221 = vadd.f32 %v1219, %v1220
    %v1222 = vsel %vm1120, %v1091, 0.0
    %v1223 = vadd.f32 %v1221, %v1222
    %v1224 = vsel %vm1120, %v1092, 0.0
    %v1225 = vadd.f32 %v1223, %v1224
    %v1226 = vsel %vm1120, %v1093, 0.0
    %v1227 = vadd.f32 %v1225, %v1226
    %v1228 = vsel %vm1120, %v1094, 0.0
    %v1229 = vadd.f32 %v1227, %v1228
    %v1230 = vsel %vm1120, %v1095, 0.0
    %v1231 = vadd.f32 %v1229, %v1230
    %v1232 = vsel %vm1120, %v1096, 0.0
    %v1233 = vadd.f32 %v1231, %v1232
    %v1234 = vsel %vm1120, %v1097, 0.0
    %v1235 = vadd.f32 %v1233, %v1234
    %v1236 = vsel %vm1120, %v1098, 0.0
    %v1237 = vadd.f32 %v1235, %v1236
    %v1238 = vsel %vm1120, %v1099, 0.0
    %v1239 = vadd.f32 %v1237, %v1238
    %v1240 = vsel %vm1120, %v1100, 0.0
    %v1241 = vadd.f32 %v1239, %v1240
    %v1242 = vsel %vm1120, %v1101, 0.0
    %v1243 = vadd.f32 %v1241, %v1242
    %v1244 = vsel %vm1120, %v1102, 0.0
    %v1245 = vadd.f32 %v1243, %v1244
    %v1246 = vsel %vm1120, %v1103, 0.0
    %v1247 = vadd.f32 %v1245, %v1246
    %v1248 = vsel %vm1120, %v1104, 0.0
    %v1249 = vadd.f32 %v1247, %v1248
    %v1250 = vsel %vm1120, %v1105, 0.0
    %v1251 = vadd.f32 %v1249, %v1250
    %v1252 = vsel %vm1120, %v1106, 0.0
    %v1253 = vadd.f32 %v1251, %v1252
    %v1254 = vsel %vm1120, %v1107, 0.0
    %v1255 = vadd.f32 %v1253, %v1254
    %v1256 = vsel %vm1120, %v1108, 0.0
    %v1257 = vadd.f32 %v1255, %v1256
    %v1258 = vsel %vm1120, %v1109, 0.0
    %v1259 = vadd.f32 %v1257, %v1258
    %v1260 = vsel %vm1120, %v1110, 0.0
    %v1261 = vadd.f32 %v1259, %v1260
    %v1262 = vsel %vm1120, %v1111, 0.0
    %v1263 = vadd.f32 %v1261, %v1262
    %v1264 = vsel %vm1120, %v1112, 0.0
    %v1265 = vadd.f32 %v1263, %v1264
    %v1266 = vsel %vm1120, %v1113, 0.0
    %v1267 = vadd.f32 %v1265, %v1266
    %v1268 = vsel %vm1120, %v1114, 0.0
    %v1269 = vadd.f32 %v1267, %v1268
    %v1270 = vsel %vm1120, %v1115, 0.0
    %v1271 = vadd.f32 %v1269, %v1270
    %v1272 = vsel %vm1120, %v1116, 0.0
    %v1273 = vadd.f32 %v1271, %v1272
    %v1274 = vsel %vm1120, %v1117, 0.0
    %v1275 = vadd.f32 %v1273, %v1274
    %v1276 = vsel %vm1120, %v1118, 0.0
    %v1277 = vadd.f32 %v1275, %v1276
    %v1278 = vsel %vm1120, %v1119, 0.0
    %v1279 = vadd.f32 %v1277, %v1278
    %v1280 = vrot.slane %v1279, 4
    %v1281 = vadd.f32 %v1279, %v1280
    %v1282 = vrot.slane %v1281, 2
    %v1283 = vadd.f32 %v1281, %v1282
    %v1284 = vrot.slane %v1283, 1
    %v1285 = vadd.f32 %v1283, %v1284
    %vm1286 = vcmask 253952
    %1287 = vst.msk [vmem:[#allocation2] sm:$0x1] %vm1286, %v1285
    %v1288 = vmul.f32 %v1040, %v1040
    %v1289 = vmul.f32 %v1041, %v1041
    %v1290 = vmul.f32 %v1042, %v1042
    %v1291 = vmul.f32 %v1043, %v1043
    %v1292 = vmul.f32 %v1044, %v1044
    %v1293 = vmul.f32 %v1045, %v1045
    %v1294 = vmul.f32 %v1046, %v1046
    %v1295 = vmul.f32 %v1047, %v1047
    %v1296 = vmul.f32 %v1048, %v1048
    %v1297 = vmul.f32 %v1049, %v1049
    %v1298 = vmul.f32 %v1050, %v1050
    %v1299 = vmul.f32 %v1051, %v1051
    %v1300 = vmul.f32 %v1052, %v1052
    %v1301 = vmul.f32 %v1053, %v1053
    %v1302 = vmul.f32 %v1054, %v1054
    %v1303 = vmul.f32 %v1055, %v1055
    %v1304 = vmul.f32 %v1056, %v1056
    %v1305 = vmul.f32 %v1057, %v1057
    %v1306 = vmul.f32 %v1058, %v1058
    %v1307 = vmul.f32 %v1059, %v1059
    %v1308 = vmul.f32 %v1060, %v1060
    %v1309 = vmul.f32 %v1061, %v1061
    %v1310 = vmul.f32 %v1062, %v1062
    %v1311 = vmul.f32 %v1063, %v1063
    %v1312 = vmul.f32 %v1064, %v1064
    %v1313 = vmul.f32 %v1065, %v1065
    %v1314 = vmul.f32 %v1066, %v1066
    %v1315 = vmul.f32 %v1067, %v1067
    %v1316 = vmul.f32 %v1068, %v1068
    %v1317 = vmul.f32 %v1069, %v1069
    %v1318 = vmul.f32 %v1070, %v1070
    %v1319 = vmul.f32 %v1071, %v1071
    %v1320 = vmul.f32 %v1072, %v1072
    %v1321 = vmul.f32 %v1073, %v1073
    %v1322 = vmul.f32 %v1074, %v1074
    %v1323 = vmul.f32 %v1075, %v1075
    %v1324 = vmul.f32 %v1076, %v1076
    %v1325 = vmul.f32 %v1077, %v1077
    %v1326 = vmul.f32 %v1078, %v1078
    %v1327 = vmul.f32 %v1079, %v1079
    %v1328 = vmul.f32 %v1080, %v1080
    %v1329 = vmul.f32 %v1081, %v1081
    %v1330 = vmul.f32 %v1082, %v1082
    %v1331 = vmul.f32 %v1083, %v1083
    %v1332 = vmul.f32 %v1084, %v1084
    %v1333 = vmul.f32 %v1085, %v1085
    %v1334 = vmul.f32 %v1086, %v1086
    %v1335 = vmul.f32 %v1087, %v1087
    %v1336 = vmul.f32 %v1088, %v1088
    %v1337 = vmul.f32 %v1089, %v1089
    %v1338 = vmul.f32 %v1090, %v1090
    %v1339 = vmul.f32 %v1091, %v1091
    %v1340 = vmul.f32 %v1092, %v1092
    %v1341 = vmul.f32 %v1093, %v1093
    %v1342 = vmul.f32 %v1094, %v1094
    %v1343 = vmul.f32 %v1095, %v1095
    %v1344 = vmul.f32 %v1096, %v1096
    %v1345 = vmul.f32 %v1097, %v1097
    %v1346 = vmul.f32 %v1098, %v1098
    %v1347 = vmul.f32 %v1099, %v1099
    %v1348 = vmul.f32 %v1100, %v1100
    %v1349 = vmul.f32 %v1101, %v1101
    %v1350 = vmul.f32 %v1102, %v1102
    %v1351 = vmul.f32 %v1103, %v1103
    %v1352 = vmul.f32 %v1104, %v1104
    %v1353 = vmul.f32 %v1105, %v1105
    %v1354 = vmul.f32 %v1106, %v1106
    %v1355 = vmul.f32 %v1107, %v1107
    %v1356 = vmul.f32 %v1108, %v1108
    %v1357 = vmul.f32 %v1109, %v1109
    %v1358 = vmul.f32 %v1110, %v1110
    %v1359 = vmul.f32 %v1111, %v1111
    %v1360 = vmul.f32 %v1112, %v1112
    %v1361 = vmul.f32 %v1113, %v1113
    %v1362 = vmul.f32 %v1114, %v1114
    %v1363 = vmul.f32 %v1115, %v1115
    %v1364 = vmul.f32 %v1116, %v1116
    %v1365 = vmul.f32 %v1117, %v1117
    %v1366 = vmul.f32 %v1118, %v1118
    %v1367 = vmul.f32 %v1119, %v1119
    %v1368 = vsel %vm1120, %v1288, 0.0
    %v1369 = vsel %vm1120, %v1289, 0.0
    %v1370 = vadd.f32 %v1368, %v1369
    %v1371 = vsel %vm1120, %v1290, 0.0
    %v1372 = vadd.f32 %v1370, %v1371
    %v1373 = vsel %vm1120, %v1291, 0.0
    %v1374 = vadd.f32 %v1372, %v1373
    %v1375 = vsel %vm1120, %v1292, 0.0
    %v1376 = vadd.f32 %v1374, %v1375
    %v1377 = vsel %vm1120, %v1293, 0.0
    %v1378 = vadd.f32 %v1376, %v1377
    %v1379 = vsel %vm1120, %v1294, 0.0
    %v1380 = vadd.f32 %v1378, %v1379
    %v1381 = vsel %vm1120, %v1295, 0.0
    %v1382 = vadd.f32 %v1380, %v1381
    %v1383 = vsel %vm1120, %v1296, 0.0
    %v1384 = vadd.f32 %v1382, %v1383
    %v1385 = vsel %vm1120, %v1297, 0.0
    %v1386 = vadd.f32 %v1384, %v1385
    %v1387 = vsel %vm1120, %v1298, 0.0
    %v1388 = vadd.f32 %v1386, %v1387
    %v1389 = vsel %vm1120, %v1299, 0.0
    %v1390 = vadd.f32 %v1388, %v1389
    %v1391 = vsel %vm1120, %v1300, 0.0
    %v1392 = vadd.f32 %v1390, %v1391
    %v1393 = vsel %vm1120, %v1301, 0.0
    %v1394 = vadd.f32 %v1392, %v1393
    %v1395 = vsel %vm1120, %v1302, 0.0
    %v1396 = vadd.f32 %v1394, %v1395
    %v1397 = vsel %vm1120, %v1303, 0.0
    %v1398 = vadd.f32 %v1396, %v1397
    %v1399 = vsel %vm1120, %v1304, 0.0
    %v1400 = vadd.f32 %v1398, %v1399
    %v1401 = vsel %vm1120, %v1305, 0.0
    %v1402 = vadd.f32 %v1400, %v1401
    %v1403 = vsel %vm1120, %v1306, 0.0
    %v1404 = vadd.f32 %v1402, %v1403
    %v1405 = vsel %vm1120, %v1307, 0.0
    %v1406 = vadd.f32 %v1404, %v1405
    %v1407 = vsel %vm1120, %v1308, 0.0
    %v1408 = vadd.f32 %v1406, %v1407
    %v1409 = vsel %vm1120, %v1309, 0.0
    %v1410 = vadd.f32 %v1408, %v1409
    %v1411 = vsel %vm1120, %v1310, 0.0
    %v1412 = vadd.f32 %v1410, %v1411
    %v1413 = vsel %vm1120, %v1311, 0.0
    %v1414 = vadd.f32 %v1412, %v1413
    %v1415 = vsel %vm1120, %v1312, 0.0
    %v1416 = vadd.f32 %v1414, %v1415
    %v1417 = vsel %vm1120, %v1313, 0.0
    %v1418 = vadd.f32 %v1416, %v1417
    %v1419 = vsel %vm1120, %v1314, 0.0
    %v1420 = vadd.f32 %v1418, %v1419
    %v1421 = vsel %vm1120, %v1315, 0.0
    %v1422 = vadd.f32 %v1420, %v1421
    %v1423 = vsel %vm1120, %v1316, 0.0
    %v1424 = vadd.f32 %v1422, %v1423
    %v1425 = vsel %vm1120, %v1317, 0.0
    %v1426 = vadd.f32 %v1424, %v1425
    %v1427 = vsel %vm1120, %v1318, 0.0
    %v1428 = vadd.f32 %v1426, %v1427
    %v1429 = vsel %vm1120, %v1319, 0.0
    %v1430 = vadd.f32 %v1428, %v1429
    %v1431 = vsel %vm1120, %v1320, 0.0
    %v1432 = vadd.f32 %v1430, %v1431
    %v1433 = vsel %vm1120, %v1321, 0.0
    %v1434 = vadd.f32 %v1432, %v1433
    %v1435 = vsel %vm1120, %v1322, 0.0
    %v1436 = vadd.f32 %v1434, %v1435
    %v1437 = vsel %vm1120, %v1323, 0.0
    %v1438 = vadd.f32 %v1436, %v1437
    %v1439 = vsel %vm1120, %v1324, 0.0
    %v1440 = vadd.f32 %v1438, %v1439
    %v1441 = vsel %vm1120, %v1325, 0.0
    %v1442 = vadd.f32 %v1440, %v1441
    %v1443 = vsel %vm1120, %v1326, 0.0
    %v1444 = vadd.f32 %v1442, %v1443
    %v1445 = vsel %vm1120, %v1327, 0.0
    %v1446 = vadd.f32 %v1444, %v1445
    %v1447 = vsel %vm1120, %v1328, 0.0
    %v1448 = vadd.f32 %v1446, %v1447
    %v1449 = vsel %vm1120, %v1329, 0.0
    %v1450 = vadd.f32 %v1448, %v1449
    %v1451 = vsel %vm1120, %v1330, 0.0
    %v1452 = vadd.f32 %v1450, %v1451
    %v1453 = vsel %vm1120, %v1331, 0.0
    %v1454 = vadd.f32 %v1452, %v1453
    %v1455 = vsel %vm1120, %v1332, 0.0
    %v1456 = vadd.f32 %v1454, %v1455
    %v1457 = vsel %vm1120, %v1333, 0.0
    %v1458 = vadd.f32 %v1456, %v1457
    %v1459 = vsel %vm1120, %v1334, 0.0
    %v1460 = vadd.f32 %v1458, %v1459
    %v1461 = vsel %vm1120, %v1335, 0.0
    %v1462 = vadd.f32 %v1460, %v1461
    %v1463 = vsel %vm1120, %v1336, 0.0
    %v1464 = vadd.f32 %v1462, %v1463
    %v1465 = vsel %vm1120, %v1337, 0.0
    %v1466 = vadd.f32 %v1464, %v1465
    %v1467 = vsel %vm1120, %v1338, 0.0
    %v1468 = vadd.f32 %v1466, %v1467
    %v1469 = vsel %vm1120, %v1339, 0.0
    %v1470 = vadd.f32 %v1468, %v1469
    %v1471 = vsel %vm1120, %v1340, 0.0
    %v1472 = vadd.f32 %v1470, %v1471
    %v1473 = vsel %vm1120, %v1341, 0.0
    %v1474 = vadd.f32 %v1472, %v1473
    %v1475 = vsel %vm1120, %v1342, 0.0
    %v1476 = vadd.f32 %v1474, %v1475
    %v1477 = vsel %vm1120, %v1343, 0.0
    %v1478 = vadd.f32 %v1476, %v1477
    %v1479 = vsel %vm1120, %v1344, 0.0
    %v1480 = vadd.f32 %v1478, %v1479
    %v1481 = vsel %vm1120, %v1345, 0.0
    %v1482 = vadd.f32 %v1480, %v1481
    %v1483 = vsel %vm1120, %v1346, 0.0
    %v1484 = vadd.f32 %v1482, %v1483
    %v1485 = vsel %vm1120, %v1347, 0.0
    %v1486 = vadd.f32 %v1484, %v1485
    %v1487 = vsel %vm1120, %v1348, 0.0
    %v1488 = vadd.f32 %v1486, %v1487
    %v1489 = vsel %vm1120, %v1349, 0.0
    %v1490 = vadd.f32 %v1488, %v1489
    %v1491 = vsel %vm1120, %v1350, 0.0
    %v1492 = vadd.f32 %v1490, %v1491
    %v1493 = vsel %vm1120, %v1351, 0.0
    %v1494 = vadd.f32 %v1492, %v1493
    %v1495 = vsel %vm1120, %v1352, 0.0
    %v1496 = vadd.f32 %v1494, %v1495
    %v1497 = vsel %vm1120, %v1353, 0.0
    %v1498 = vadd.f32 %v1496, %v1497
    %v1499 = vsel %vm1120, %v1354, 0.0
    %v1500 = vadd.f32 %v1498, %v1499
    %v1501 = vsel %vm1120, %v1355, 0.0
    %v1502 = vadd.f32 %v1500, %v1501
    %v1503 = vsel %vm1120, %v1356, 0.0
    %v1504 = vadd.f32 %v1502, %v1503
    %v1505 = vsel %vm1120, %v1357, 0.0
    %v1506 = vadd.f32 %v1504, %v1505
    %v1507 = vsel %vm1120, %v1358, 0.0
    %v1508 = vadd.f32 %v1506, %v1507
    %v1509 = vsel %vm1120, %v1359, 0.0
    %v1510 = vadd.f32 %v1508, %v1509
    %v1511 = vsel %vm1120, %v1360, 0.0
    %v1512 = vadd.f32 %v1510, %v1511
    %v1513 = vsel %vm1120, %v1361, 0.0
    %v1514 = vadd.f32 %v1512, %v1513
    %v1515 = vsel %vm1120, %v1362, 0.0
    %v1516 = vadd.f32 %v1514, %v1515
    %v1517 = vsel %vm1120, %v1363, 0.0
    %v1518 = vadd.f32 %v1516, %v1517
    %v1519 = vsel %vm1120, %v1364, 0.0
    %v1520 = vadd.f32 %v1518, %v1519
    %v1521 = vsel %vm1120, %v1365, 0.0
    %v1522 = vadd.f32 %v1520, %v1521
    %v1523 = vsel %vm1120, %v1366, 0.0
    %v1524 = vadd.f32 %v1522, %v1523
    %v1525 = vsel %vm1120, %v1367, 0.0
    %v1526 = vadd.f32 %v1524, %v1525
    %v1527 = vrot.slane %v1526, 4
    %v1528 = vadd.f32 %v1526, %v1527
    %v1529 = vrot.slane %v1528, 2
    %v1530 = vadd.f32 %v1528, %v1529
    %v1531 = vrot.slane %v1530, 1
    %v1532 = vadd.f32 %v1530, %v1531
    %1533 = vst.msk [vmem:[#allocation4] sm:$0x1] %vm1286, %v1532
    // Predicated region
    $region10: #{tpu_custom_call.1} parent=1 // pred_check
      _
    $region11: #{tpu_custom_call.1} parent=1 // pred_check_branch
      %1535 = sbr.rel (0) target = $region13
    $region12: #{tpu_custom_call.1} parent=1 // pred_region
      %1537 = vsyncadd [#allocation3], 0
      %s1539 = sshll.u32 [#allocation2], 4
      %s1540 = int_to_ptr.vmem [resolvable:$true] %s1539
      %s1541 = sshll.u32 %s2, 4
      %s1542 = int_to_ptr.hbm [resolvable:$true] %s1541
      %1544 = dma.vmem_to_hbm [thread:$0]  %s1540, 16, %s1542, [#allocation3]
    $region13: #{tpu_custom_call.1} parent=1 // pred_fallthru
      _
    // Predicated region
    $region14: #{tpu_custom_call.1} parent=1 // pred_check
      _
    $region15: #{tpu_custom_call.1} parent=1 // pred_check_branch
      %1546 = sbr.rel (0) target = $region17
    $region16: #{tpu_custom_call.1} parent=1 // pred_region
      %1548 = vsyncadd [#allocation5], 0
      %s1550 = sshll.u32 [#allocation4], 4
      %s1551 = int_to_ptr.vmem [resolvable:$true] %s1550
      %s1552 = sshll.u32 %s3, 4
      %s1553 = int_to_ptr.hbm [resolvable:$true] %s1552
      %1555 = dma.vmem_to_hbm [thread:$0]  %s1551, 16, %s1553, [#allocation5]
    $region17: #{tpu_custom_call.1} parent=1 // pred_fallthru
      _
    // Predicated region
    $region18: #{tpu_custom_call.1} parent=1 // pred_check
      _
    $region19: #{tpu_custom_call.1} parent=1 // pred_check_branch
      %1557 = sbr.rel (0) target = $region21
    $region20: #{tpu_custom_call.1} parent=1 // pred_region
      %1559 = dma.done [#allocation3], 16
    $region21: #{tpu_custom_call.1} parent=1 // pred_fallthru
      _
    // Predicated region
    $region22: #{tpu_custom_call.1} parent=1 // pred_check
      _
    $region23: #{tpu_custom_call.1} parent=1 // pred_check_branch
      %1561 = sbr.rel (0) target = $region25
    $region24: #{tpu_custom_call.1} parent=1 // pred_region
      %1563 = dma.done [#allocation5], 16
    $region25: #{tpu_custom_call.1} parent=1 // pred_fallthru
      _
    %1564 = vsyncpa [#allocation3], 1
    %1565 = vsyncpa [#allocation5], 1

</llo_original>
